<compile_context>
chip_gen: v7x
topology: tpu7x:2x2x1
jax: 0.10.0
libtpu: 0.0.40
codegen_flags: <defaults>
</compile_context>

<pallas_src>
import functools

import jax
import jax.numpy as jnp
import numpy as np
from jax.experimental import pallas as pl
from jax.experimental.pallas import tpu as pltpu

LANE = 128


def _round_up(x, m):
    return (x + m - 1) // m * m


def _window_attn_kernel(x_ref, wqkv_ref, bqkv_ref, wp_ref, bp_ref, o_ref, *,
                        wb, n, num_heads, head_dim, scale):
    """One grid step processes `wb` windows.

    x_ref:    (wb*n, Cp)   folded window tokens (channels zero-padded to Cp)
    wqkv_ref: (Cp, 3C)     qkv weight (transposed; padded rows are zero)
    bqkv_ref: (1, 3C)      qkv bias
    wp_ref:   (C, Cp)      proj weight (transposed; padded cols are zero)
    bp_ref:   (1, Cp)      proj bias (zero-padded)
    o_ref:    (wb*n, Cp)   folded output (lane-dense store)
    """
    C = num_heads * head_dim

    x = x_ref[...]                                           # (wb*n, Cp), input dtype

    # Fused QKV projection over all windows in this block; bias added once.
    qkv = jnp.dot(x, wqkv_ref[...], preferred_element_type=jnp.float32)
    qkv = (qkv + bqkv_ref[...].astype(jnp.float32)).astype(x.dtype)      # (wb*n, 3C)

    # Per-head attention, batched over the wb windows (single batch dim on the MXU).
    # TODO(synk): Mosaic dot_general supports a single batch dim, so heads stay as a short
    # static loop instead of a (window, head) double-batched einsum.
    head_outs = []
    for h in range(num_heads):
        lo = h * head_dim
        q = qkv[:, 0 * C + lo: 0 * C + lo + head_dim].reshape(wb, n, head_dim)
        k = qkv[:, 1 * C + lo: 1 * C + lo + head_dim].reshape(wb, n, head_dim)
        v = qkv[:, 2 * C + lo: 2 * C + lo + head_dim].reshape(wb, n, head_dim)

        s = jnp.einsum("bnd,bmd->bnm", q, k,
                       preferred_element_type=jnp.float32) * scale       # (wb, n, n) f32
        s = s - jnp.max(s, axis=-1, keepdims=True)
        p = jnp.exp(s)                                                    # f32 softmax
        p = p * pl.reciprocal(jnp.sum(p, axis=-1, keepdims=True), approx=True)
        o_h = jnp.einsum("bnm,bmd->bnd", p.astype(v.dtype), v,
                         preferred_element_type=jnp.float32)              # (wb, n, d)
        head_outs.append(o_h.reshape(wb * n, head_dim))

    out = jnp.concatenate(head_outs, axis=-1).astype(x.dtype)             # (wb*n, C)

    # Output projection + bias, lane-dense store (Cp multiple of 128).
    y = jnp.dot(out, wp_ref[...], preferred_element_type=jnp.float32)
    y = y + bp_ref[...].astype(jnp.float32)
    o_ref[...] = y.astype(o_ref.dtype)


def window_attention(x, wqkv, bqkv, wproj, bproj, *, num_heads, windows_per_block=None):
    """x: (B_, N, C); wqkv: (C, 3C) (= torch qkv.weight.T); bqkv: (3C,);
    wproj: (C, C) (= torch proj.weight.T); bproj: (C,)."""
    B_, N, C = x.shape
    assert C % num_heads == 0
    head_dim = C // num_heads
    scale = head_dim ** (-0.5)
    dtype = x.dtype

    # Pad channels to the lane boundary for lane-dense loads/stores and aligned matmuls.
    Cp = _round_up(C, LANE)

    # Windows per grid step: amortize per-step pipeline overhead (~0.35us) by folding wb
    # windows into one (wb*N, Cp) projection matmul (target ~512 rows), while keeping >=2
    # grid steps when possible so both v7x TensorCores get work.
    if windows_per_block is None:
        wb = max(1, min(B_, max(1, 512 // N)))
        wb = min(wb, max(1, -(-B_ // 2)))      # keep grid length >= 2 when B_ allows
    else:
        wb = max(1, min(windows_per_block, B_))
    while (wb * N) % 8 != 0:                   # satisfy the (8, 128) block-shape rule
        wb += 1
    Bp = _round_up(B_, wb)
    grid = (Bp // wb,)

    # Zero-padded, pre-folded operands (wrapper-side layout plumbing, not compute).
    x_p = jnp.zeros((Bp, N, Cp), dtype).at[:B_, :, :C].set(x)
    x2 = x_p.reshape(Bp * N, Cp)
    wqkv_p = jnp.zeros((Cp, 3 * C), dtype).at[:C, :].set(wqkv.astype(dtype))
    bqkv_2 = bqkv.reshape(1, 3 * C).astype(dtype)
    wp_p = jnp.zeros((C, Cp), dtype).at[:, :C].set(wproj.astype(dtype))
    bp_p = jnp.zeros((1, Cp), dtype).at[0, :C].set(bproj.astype(dtype))

    kernel = functools.partial(_window_attn_kernel, wb=wb, n=N,
                               num_heads=num_heads, head_dim=head_dim, scale=scale)

    itemsize = jnp.dtype(dtype).itemsize
    cost = pl.CostEstimate(
        flops=int(Bp * (2 * N * Cp * 3 * C        # qkv projection
                        + 4 * N * N * C           # scores + attn @ v (all heads)
                        + 2 * N * C * Cp)),       # output projection
        transcendentals=int(Bp * num_heads * N * N),
        bytes_accessed=int((2 * Bp * N * Cp + Cp * 3 * C + C * Cp + 3 * C + Cp) * itemsize),
    )

    out2 = pl.pallas_call(
        kernel,
        out_shape=jax.ShapeDtypeStruct((Bp * N, Cp), dtype),
        grid_spec=pltpu.PrefetchScalarGridSpec(
            num_scalar_prefetch=0,
            grid=grid,
            in_specs=[
                pl.BlockSpec((wb * N, Cp), lambda b: (b, 0)),   # x: wb windows per step
                pl.BlockSpec((Cp, 3 * C), lambda b: (0, 0)),    # qkv weight (resident)
                pl.BlockSpec((1, 3 * C), lambda b: (0, 0)),     # qkv bias
                pl.BlockSpec((C, Cp), lambda b: (0, 0)),        # proj weight (resident)
                pl.BlockSpec((1, Cp), lambda b: (0, 0)),        # proj bias
            ],
            out_specs=pl.BlockSpec((wb * N, Cp), lambda b: (b, 0)),
        ),
        compiler_params=pltpu.CompilerParams(
            dimension_semantics=("parallel",),
            vmem_limit_bytes=32 * 1024 * 1024,
        ),
        cost_estimate=cost,
    )(x2, wqkv_p, bqkv_2, wp_p, bp_p)

    return out2.reshape(Bp, N, Cp)[:B_, :, :C]


def window_attention_ref(x, wqkv, bqkv, wproj, bproj, *, num_heads):
    """Pure-JAX reference mirroring the PyTorch forward."""
    B_, N, C = x.shape
    d = C // num_heads
    scale = d ** (-0.5)
    qkv = x @ wqkv + bqkv                                     # (B_, N, 3C)
    qkv = qkv.reshape(B_, N, 3, num_heads, d).transpose(2, 0, 3, 1, 4)
    q, k, v = qkv[0], qkv[1], qkv[2]                          # (B_, H, N, d)
    attn = jnp.einsum("bhnd,bhmd->bhnm", q, k) * scale
    attn = jax.nn.softmax(attn, axis=-1)
    out = jnp.einsum("bhnm,bhmd->bhnd", attn, v)
    out = out.transpose(0, 2, 1, 3).reshape(B_, N, C)
    return out @ wproj + bproj


if __name__ == "__main__":
    # window_size=4 -> N=16 tokens per window, dim=32, 4 heads, 2 windows.
    B_, N, C, num_heads = 2, 16, 32, 4

    key = jax.random.PRNGKey(0)
    kx, k1, k2, k3, k4 = jax.random.split(key, 5)

    x = jax.random.normal(kx, (B_, N, C), dtype=jnp.float32)

    # PyTorch shapes: qkv.weight (3C, C), proj.weight (C, C); stored pre-transposed so the
    # kernel computes x @ W.
    wqkv = jax.random.normal(k1, (C, 3 * C), dtype=jnp.float32) * 0.05
    bqkv = jax.random.normal(k2, (3 * C,), dtype=jnp.float32) * 0.05
    wproj = jax.random.normal(k3, (C, C), dtype=jnp.float32) * 0.05
    bproj = jax.random.normal(k4, (C,), dtype=jnp.float32) * 0.05

    out = window_attention(x, wqkv, bqkv, wproj, bproj, num_heads=num_heads)
    out = jax.block_until_ready(out)

    ref = window_attention_ref(x, wqkv, bqkv, wproj, bproj, num_heads=num_heads)
    # Tolerance relaxed vs. exact softmax because the kernel uses the EUP approximate
    # reciprocal (pl.reciprocal(..., approx=True)) for the softmax denominator.
    np.testing.assert_allclose(np.asarray(out), np.asarray(ref), rtol=2e-3, atol=2e-3)

    print("KERNEL_OK")
</pallas_src>

<mosaic_0001>
module attributes {stable_mosaic.version = 11 : i64} {
  func.func @_window_attn_kernel(%arg0: i32, %arg1: memref<16x128xf32, #tpu.memory_space<vmem>>, %arg2: memref<128x96xf32, #tpu.memory_space<vmem>>, %arg3: memref<1x96xf32, #tpu.memory_space<vmem>>, %arg4: memref<32x128xf32, #tpu.memory_space<vmem>>, %arg5: memref<1x128xf32, #tpu.memory_space<vmem>>, %arg6: memref<16x128xf32, #tpu.memory_space<vmem>>) attributes {dimension_semantics = [#tpu.dimension_semantics<parallel>], iteration_bounds = array<i64: 2>, scalar_prefetch = 0 : i64, scratch_operands = 0 : i64, tpu.core_type = #tpu.core_type<tc>, window_params = [{transform_indices = @transform_0, window_bounds = array<i64: 16, 128>}, {pipeline_mode = #tpu.pipeline_mode<synchronous>, transform_indices = @transform_1, window_bounds = array<i64: 128, 96>}, {pipeline_mode = #tpu.pipeline_mode<synchronous>, transform_indices = @transform_2, window_bounds = array<i64: 1, 96>}, {pipeline_mode = #tpu.pipeline_mode<synchronous>, transform_indices = @transform_3, window_bounds = array<i64: 32, 128>}, {pipeline_mode = #tpu.pipeline_mode<synchronous>, transform_indices = @transform_4, window_bounds = array<i64: 1, 128>}, {transform_indices = @transform_5, window_bounds = array<i64: 16, 128>}]} {
    %c0 = arith.constant 0 : index
    %c0_0 = arith.constant 0 : index
    %0 = vector.load %arg1[%c0, %c0_0] : memref<16x128xf32, #tpu.memory_space<vmem>>, vector<16x128xf32>
    %c0_1 = arith.constant 0 : index
    %c0_2 = arith.constant 0 : index
    %1 = vector.load %arg2[%c0_1, %c0_2] : memref<128x96xf32, #tpu.memory_space<vmem>>, vector<128x96xf32>
    %cst = arith.constant dense<0.000000e+00> : vector<16x96xf32>
    %2 = tpu.matmul %0, %1, %cst {dimension_numbers = #tpu.dot_dimension_numbers<[1], [0], [0], [1], [0, 0, 1, 1], [], []>} : vector<16x128xf32>, vector<128x96xf32>, vector<16x96xf32> -> vector<16x96xf32>
    %c0_3 = arith.constant 0 : index
    %c0_4 = arith.constant 0 : index
    %3 = vector.load %arg3[%c0_3, %c0_4] : memref<1x96xf32, #tpu.memory_space<vmem>>, vector<1x96xf32>
    %4 = vector.broadcast %3 : vector<1x96xf32> to vector<16x96xf32>
    %5 = arith.addf %2, %4 : vector<16x96xf32>
    %6 = vector.extract_strided_slice %5 {offsets = [0, 0], sizes = [16, 8], strides = [1, 1]} : vector<16x96xf32> to vector<16x8xf32>
    %7 = vector.shape_cast %6 : vector<16x8xf32> to vector<1x16x8xf32>
    %8 = vector.extract_strided_slice %5 {offsets = [0, 32], sizes = [16, 8], strides = [1, 1]} : vector<16x96xf32> to vector<16x8xf32>
    %9 = vector.shape_cast %8 : vector<16x8xf32> to vector<1x16x8xf32>
    %10 = vector.extract_strided_slice %5 {offsets = [0, 64], sizes = [16, 8], strides = [1, 1]} : vector<16x96xf32> to vector<16x8xf32>
    %11 = vector.shape_cast %10 : vector<16x8xf32> to vector<1x16x8xf32>
    "tpu.trace_start"() <{level = 10 : i32, message = "bnd,bmd->bnm"}> : () -> ()
    %cst_5 = arith.constant dense<0.000000e+00> : vector<1x16x16xf32>
    %12 = tpu.matmul %7, %9, %cst_5 {dimension_numbers = #tpu.dot_dimension_numbers<[2], [2], [1], [1], [0, 0, 0, 1, 1, 1], [0], [0]>} : vector<1x16x8xf32>, vector<1x16x8xf32>, vector<1x16x16xf32> -> vector<1x16x16xf32>
    "tpu.trace_stop"() : () -> ()
    %cst_6 = arith.constant 0.353553385 : f32
    %13 = vector.broadcast %cst_6 : f32 to vector<1x16x16xf32>
    %14 = arith.mulf %12, %13 : vector<1x16x16xf32>
    %cst_7 = arith.constant dense<0xFF800000> : vector<1x16xf32>
    %15 = vector.multi_reduction <maximumf>, %14, %cst_7 [2] : vector<1x16x16xf32> to vector<1x16xf32>
    %16 = vector.shape_cast %15 : vector<1x16xf32> to vector<1x16x1xf32>
    %17 = vector.broadcast %16 : vector<1x16x1xf32> to vector<1x16x16xf32>
    %18 = arith.subf %14, %17 : vector<1x16x16xf32>
    %19 = math.exp %18 : vector<1x16x16xf32>
    %cst_8 = arith.constant dense<0.000000e+00> : vector<1x16xf32>
    %20 = vector.multi_reduction <add>, %19, %cst_8 [2] : vector<1x16x16xf32> to vector<1x16xf32>
    %21 = vector.shape_cast %20 : vector<1x16xf32> to vector<1x16x1xf32>
    %22 = tpu.reciprocal %21 {approx = true} : vector<1x16x1xf32> -> vector<1x16x1xf32>
    %23 = vector.broadcast %22 : vector<1x16x1xf32> to vector<1x16x16xf32>
    %24 = arith.mulf %19, %23 : vector<1x16x16xf32>
    "tpu.trace_start"() <{level = 10 : i32, message = "bnm,bmd->bnd"}> : () -> ()
    %cst_9 = arith.constant dense<0.000000e+00> : vector<1x16x8xf32>
    %25 = tpu.matmul %24, %11, %cst_9 {dimension_numbers = #tpu.dot_dimension_numbers<[2], [1], [1], [2], [0, 0, 0, 1, 1, 2], [0], [0]>} : vector<1x16x16xf32>, vector<1x16x8xf32>, vector<1x16x8xf32> -> vector<1x16x8xf32>
    "tpu.trace_stop"() : () -> ()
    %26 = vector.shape_cast %25 : vector<1x16x8xf32> to vector<16x8xf32>
    %27 = vector.extract_strided_slice %5 {offsets = [0, 8], sizes = [16, 8], strides = [1, 1]} : vector<16x96xf32> to vector<16x8xf32>
    %28 = vector.shape_cast %27 : vector<16x8xf32> to vector<1x16x8xf32>
    %29 = vector.extract_strided_slice %5 {offsets = [0, 40], sizes = [16, 8], strides = [1, 1]} : vector<16x96xf32> to vector<16x8xf32>
    %30 = vector.shape_cast %29 : vector<16x8xf32> to vector<1x16x8xf32>
    %31 = vector.extract_strided_slice %5 {offsets = [0, 72], sizes = [16, 8], strides = [1, 1]} : vector<16x96xf32> to vector<16x8xf32>
    %32 = vector.shape_cast %31 : vector<16x8xf32> to vector<1x16x8xf32>
    "tpu.trace_start"() <{level = 10 : i32, message = "bnd,bmd->bnm"}> : () -> ()
    %cst_10 = arith.constant dense<0.000000e+00> : vector<1x16x16xf32>
    %33 = tpu.matmul %28, %30, %cst_10 {dimension_numbers = #tpu.dot_dimension_numbers<[2], [2], [1], [1], [0, 0, 0, 1, 1, 1], [0], [0]>} : vector<1x16x8xf32>, vector<1x16x8xf32>, vector<1x16x16xf32> -> vector<1x16x16xf32>
    "tpu.trace_stop"() : () -> ()
    %cst_11 = arith.constant 0.353553385 : f32
    %34 = vector.broadcast %cst_11 : f32 to vector<1x16x16xf32>
    %35 = arith.mulf %33, %34 : vector<1x16x16xf32>
    %cst_12 = arith.constant dense<0xFF800000> : vector<1x16xf32>
    %36 = vector.multi_reduction <maximumf>, %35, %cst_12 [2] : vector<1x16x16xf32> to vector<1x16xf32>
    %37 = vector.shape_cast %36 : vector<1x16xf32> to vector<1x16x1xf32>
    %38 = vector.broadcast %37 : vector<1x16x1xf32> to vector<1x16x16xf32>
    %39 = arith.subf %35, %38 : vector<1x16x16xf32>
    %40 = math.exp %39 : vector<1x16x16xf32>
    %cst_13 = arith.constant dense<0.000000e+00> : vector<1x16xf32>
    %41 = vector.multi_reduction <add>, %40, %cst_13 [2] : vector<1x16x16xf32> to vector<1x16xf32>
    %42 = vector.shape_cast %41 : vector<1x16xf32> to vector<1x16x1xf32>
    %43 = tpu.reciprocal %42 {approx = true} : vector<1x16x1xf32> -> vector<1x16x1xf32>
    %44 = vector.broadcast %43 : vector<1x16x1xf32> to vector<1x16x16xf32>
    %45 = arith.mulf %40, %44 : vector<1x16x16xf32>
    "tpu.trace_start"() <{level = 10 : i32, message = "bnm,bmd->bnd"}> : () -> ()
    %cst_14 = arith.constant dense<0.000000e+00> : vector<1x16x8xf32>
    %46 = tpu.matmul %45, %32, %cst_14 {dimension_numbers = #tpu.dot_dimension_numbers<[2], [1], [1], [2], [0, 0, 0, 1, 1, 2], [0], [0]>} : vector<1x16x16xf32>, vector<1x16x8xf32>, vector<1x16x8xf32> -> vector<1x16x8xf32>
    "tpu.trace_stop"() : () -> ()
    %47 = vector.shape_cast %46 : vector<1x16x8xf32> to vector<16x8xf32>
    %48 = vector.extract_strided_slice %5 {offsets = [0, 16], sizes = [16, 8], strides = [1, 1]} : vector<16x96xf32> to vector<16x8xf32>
    %49 = vector.shape_cast %48 : vector<16x8xf32> to vector<1x16x8xf32>
    %50 = vector.extract_strided_slice %5 {offsets = [0, 48], sizes = [16, 8], strides = [1, 1]} : vector<16x96xf32> to vector<16x8xf32>
    %51 = vector.shape_cast %50 : vector<16x8xf32> to vector<1x16x8xf32>
    %52 = vector.extract_strided_slice %5 {offsets = [0, 80], sizes = [16, 8], strides = [1, 1]} : vector<16x96xf32> to vector<16x8xf32>
    %53 = vector.shape_cast %52 : vector<16x8xf32> to vector<1x16x8xf32>
    "tpu.trace_start"() <{level = 10 : i32, message = "bnd,bmd->bnm"}> : () -> ()
    %cst_15 = arith.constant dense<0.000000e+00> : vector<1x16x16xf32>
    %54 = tpu.matmul %49, %51, %cst_15 {dimension_numbers = #tpu.dot_dimension_numbers<[2], [2], [1], [1], [0, 0, 0, 1, 1, 1], [0], [0]>} : vector<1x16x8xf32>, vector<1x16x8xf32>, vector<1x16x16xf32> -> vector<1x16x16xf32>
    "tpu.trace_stop"() : () -> ()
    %cst_16 = arith.constant 0.353553385 : f32
    %55 = vector.broadcast %cst_16 : f32 to vector<1x16x16xf32>
    %56 = arith.mulf %54, %55 : vector<1x16x16xf32>
    %cst_17 = arith.constant dense<0xFF800000> : vector<1x16xf32>
    %57 = vector.multi_reduction <maximumf>, %56, %cst_17 [2] : vector<1x16x16xf32> to vector<1x16xf32>
    %58 = vector.shape_cast %57 : vector<1x16xf32> to vector<1x16x1xf32>
    %59 = vector.broadcast %58 : vector<1x16x1xf32> to vector<1x16x16xf32>
    %60 = arith.subf %56, %59 : vector<1x16x16xf32>
    %61 = math.exp %60 : vector<1x16x16xf32>
    %cst_18 = arith.constant dense<0.000000e+00> : vector<1x16xf32>
    %62 = vector.multi_reduction <add>, %61, %cst_18 [2] : vector<1x16x16xf32> to vector<1x16xf32>
    %63 = vector.shape_cast %62 : vector<1x16xf32> to vector<1x16x1xf32>
    %64 = tpu.reciprocal %63 {approx = true} : vector<1x16x1xf32> -> vector<1x16x1xf32>
    %65 = vector.broadcast %64 : vector<1x16x1xf32> to vector<1x16x16xf32>
    %66 = arith.mulf %61, %65 : vector<1x16x16xf32>
    "tpu.trace_start"() <{level = 10 : i32, message = "bnm,bmd->bnd"}> : () -> ()
    %cst_19 = arith.constant dense<0.000000e+00> : vector<1x16x8xf32>
    %67 = tpu.matmul %66, %53, %cst_19 {dimension_numbers = #tpu.dot_dimension_numbers<[2], [1], [1], [2], [0, 0, 0, 1, 1, 2], [0], [0]>} : vector<1x16x16xf32>, vector<1x16x8xf32>, vector<1x16x8xf32> -> vector<1x16x8xf32>
    "tpu.trace_stop"() : () -> ()
    %68 = vector.shape_cast %67 : vector<1x16x8xf32> to vector<16x8xf32>
    %69 = vector.extract_strided_slice %5 {offsets = [0, 24], sizes = [16, 8], strides = [1, 1]} : vector<16x96xf32> to vector<16x8xf32>
    %70 = vector.shape_cast %69 : vector<16x8xf32> to vector<1x16x8xf32>
    %71 = vector.extract_strided_slice %5 {offsets = [0, 56], sizes = [16, 8], strides = [1, 1]} : vector<16x96xf32> to vector<16x8xf32>
    %72 = vector.shape_cast %71 : vector<16x8xf32> to vector<1x16x8xf32>
    %73 = vector.extract_strided_slice %5 {offsets = [0, 88], sizes = [16, 8], strides = [1, 1]} : vector<16x96xf32> to vector<16x8xf32>
    %74 = vector.shape_cast %73 : vector<16x8xf32> to vector<1x16x8xf32>
    "tpu.trace_start"() <{level = 10 : i32, message = "bnd,bmd->bnm"}> : () -> ()
    %cst_20 = arith.constant dense<0.000000e+00> : vector<1x16x16xf32>
    %75 = tpu.matmul %70, %72, %cst_20 {dimension_numbers = #tpu.dot_dimension_numbers<[2], [2], [1], [1], [0, 0, 0, 1, 1, 1], [0], [0]>} : vector<1x16x8xf32>, vector<1x16x8xf32>, vector<1x16x16xf32> -> vector<1x16x16xf32>
    "tpu.trace_stop"() : () -> ()
    %cst_21 = arith.constant 0.353553385 : f32
    %76 = vector.broadcast %cst_21 : f32 to vector<1x16x16xf32>
    %77 = arith.mulf %75, %76 : vector<1x16x16xf32>
    %cst_22 = arith.constant dense<0xFF800000> : vector<1x16xf32>
    %78 = vector.multi_reduction <maximumf>, %77, %cst_22 [2] : vector<1x16x16xf32> to vector<1x16xf32>
    %79 = vector.shape_cast %78 : vector<1x16xf32> to vector<1x16x1xf32>
    %80 = vector.broadcast %79 : vector<1x16x1xf32> to vector<1x16x16xf32>
    %81 = arith.subf %77, %80 : vector<1x16x16xf32>
    %82 = math.exp %81 : vector<1x16x16xf32>
    %cst_23 = arith.constant dense<0.000000e+00> : vector<1x16xf32>
    %83 = vector.multi_reduction <add>, %82, %cst_23 [2] : vector<1x16x16xf32> to vector<1x16xf32>
    %84 = vector.shape_cast %83 : vector<1x16xf32> to vector<1x16x1xf32>
    %85 = tpu.reciprocal %84 {approx = true} : vector<1x16x1xf32> -> vector<1x16x1xf32>
    %86 = vector.broadcast %85 : vector<1x16x1xf32> to vector<1x16x16xf32>
    %87 = arith.mulf %82, %86 : vector<1x16x16xf32>
    "tpu.trace_start"() <{level = 10 : i32, message = "bnm,bmd->bnd"}> : () -> ()
    %cst_24 = arith.constant dense<0.000000e+00> : vector<1x16x8xf32>
    %88 = tpu.matmul %87, %74, %cst_24 {dimension_numbers = #tpu.dot_dimension_numbers<[2], [1], [1], [2], [0, 0, 0, 1, 1, 2], [0], [0]>} : vector<1x16x16xf32>, vector<1x16x8xf32>, vector<1x16x8xf32> -> vector<1x16x8xf32>
    "tpu.trace_stop"() : () -> ()
    %89 = vector.shape_cast %88 : vector<1x16x8xf32> to vector<16x8xf32>
    %90 = tpu.concatenate %26, %47, %68, %89 in 1 : vector<16x8xf32>, vector<16x8xf32>, vector<16x8xf32>, vector<16x8xf32> -> vector<16x32xf32>
    %c0_25 = arith.constant 0 : index
    %c0_26 = arith.constant 0 : index
    %91 = vector.load %arg4[%c0_25, %c0_26] : memref<32x128xf32, #tpu.memory_space<vmem>>, vector<32x128xf32>
    %cst_27 = arith.constant dense<0.000000e+00> : vector<16x128xf32>
    %92 = tpu.matmul %90, %91, %cst_27 {dimension_numbers = #tpu.dot_dimension_numbers<[1], [0], [0], [1], [0, 0, 1, 1], [], []>} : vector<16x32xf32>, vector<32x128xf32>, vector<16x128xf32> -> vector<16x128xf32>
    %c0_28 = arith.constant 0 : index
    %c0_29 = arith.constant 0 : index
    %93 = vector.load %arg5[%c0_28, %c0_29] : memref<1x128xf32, #tpu.memory_space<vmem>>, vector<1x128xf32>
    %94 = vector.broadcast %93 : vector<1x128xf32> to vector<16x128xf32>
    %95 = arith.addf %92, %94 : vector<16x128xf32>
    %c0_30 = arith.constant 0 : index
    %c0_31 = arith.constant 0 : index
    %96 = vector.load %arg6[%c0_30, %c0_31] : memref<16x128xf32, #tpu.memory_space<vmem>>, vector<16x128xf32>
    tpu.vector_store %arg6[%c0_30, %c0_31], %95 {strides = array<i32>} : memref<16x128xf32, #tpu.memory_space<vmem>>, vector<16x128xf32>,
    return
  }
  func.func @transform_0(%arg0: i32) -> (i32, i32) {
    %c0_i32 = arith.constant 0 : i32
    %c0_i32_0 = arith.constant 0 : i32
    return %arg0, %c0_i32 : i32, i32
  }
  func.func @transform_1(%arg0: i32) -> (i32, i32) {
    %c0_i32 = arith.constant 0 : i32
    %c0_i32_0 = arith.constant 0 : i32
    %c0_i32_1 = arith.constant 0 : i32
    return %c0_i32, %c0_i32_0 : i32, i32
  }
  func.func @transform_2(%arg0: i32) -> (i32, i32) {
    %c0_i32 = arith.constant 0 : i32
    %c0_i32_0 = arith.constant 0 : i32
    %c0_i32_1 = arith.constant 0 : i32
    return %c0_i32, %c0_i32_0 : i32, i32
  }
  func.func @transform_3(%arg0: i32) -> (i32, i32) {
    %c0_i32 = arith.constant 0 : i32
    %c0_i32_0 = arith.constant 0 : i32
    %c0_i32_1 = arith.constant 0 : i32
    return %c0_i32, %c0_i32_0 : i32, i32
  }
  func.func @transform_4(%arg0: i32) -> (i32, i32) {
    %c0_i32 = arith.constant 0 : i32
    %c0_i32_0 = arith.constant 0 : i32
    %c0_i32_1 = arith.constant 0 : i32
    return %c0_i32, %c0_i32_0 : i32, i32
  }
  func.func @transform_5(%arg0: i32) -> (i32, i32) {
    %c0_i32 = arith.constant 0 : i32
    %c0_i32_0 = arith.constant 0 : i32
    return %arg0, %c0_i32 : i32, i32
  }
}

</mosaic_0001>

<llo_original>
// kernel: tpu_custom_call.1
$region0: #{tpu_custom_call.1}
  #allocation0 [shape = 'u32[]', space=smem, size = 0x4, offset = 0x4, fixed_abs, tag = 'smem constant byte address 0x4 - core index']
  #allocation1 [shape = 'u32[144,128]{1,0:T(1,128)}', space=vmem, size = 0x12000, scoped, tag = 'internal scratch']
  %s0 = inlined_call_operand.vmem [shape: f32[32,128], index: 0, kind: input, shape index: {}]
  %s1 = inlined_call_operand.vmem [shape: f32[128,96], index: 1, kind: input, shape index: {}]
  %s2 = inlined_call_operand.vmem [shape: f32[1,96], index: 2, kind: input, shape index: {}]
  %s3 = inlined_call_operand.vmem [shape: f32[32,128], index: 3, kind: input, shape index: {}]
  %s4 = inlined_call_operand.vmem [shape: f32[1,128], index: 4, kind: input, shape index: {}]
  %s5 = inlined_call_operand.hbm [shape: f32[32,128], index: 5, kind: output, shape index: {}]
  %s6 = sld [smem:[#allocation0]]
  $region53: #{tpu_custom_call.1} parent=0
    _
  %s8 = ssub.s32 1, %s6
  %s9 = scalar_select 0, %s8, %s6
  $region1: #{tpu_custom_call.1} parent=0
    #allocation2 [shape = 'u8[16384]{0}', space=vmem, size = 0x4000, scoped, tag = 'output window, operand 0']
    #allocation3 [shape = 's32[2]{0}', space=sflag, size = 0x8, scoped, tag = 'scoped memory for tpu_custom_call.1']
    %10 = vsyncpa [#allocation3], 0
    %s11 = scalar_lea.sflag [#allocation3], 1
    %12 = vsyncpa %s11, 0
    loop: start=0, step=1, limit=4
    $region2: #{tpu_custom_call.1} parent=1 // loop_pre_header
      _
    $region3: #{tpu_custom_call.1} parent=1 // loop_header
      %s14 = sphi 0, %s18
      %p15 = scmp.ge.s32.totalorder %s14, 4
      %s24 = sphi 0, %s26
      %s27 = sphi 0, %s24
      %s28 = sphi 0, %s27
      %s44 = sphi 0, %s28
      %s48 = sphi 0, %s48
      %s50 = sphi 0, %s48
      %s51 = sphi 0, %s50
      %s65 = sphi 0, %s51
      %s69 = sphi 0, %s69
      %s71 = sphi 0, %s69
      %s72 = sphi 0, %s71
      %s86 = sphi 0, %s72
      %s90 = sphi 0, %s90
      %s92 = sphi 0, %s90
      %s93 = sphi 0, %s92
      %s107 = sphi 0, %s93
      %s111 = sphi 0, %s111
      %s113 = sphi 0, %s111
      %s114 = sphi 0, %s113
      %s128 = sphi 0, %s114
      %s134 = sphi 0, %s136
      %s137 = sphi 0, %s134
      %s138 = sphi 0, %s137
      %s154 = sphi 0, %s138
    $region4: #{tpu_custom_call.1} parent=1 // loop_header_branch
      %17 = sbr.rel (%p15) target = $region8
    $region5: #{tpu_custom_call.1} parent=1 // loop_body
      %s19 = ssub.s32 %s14, 1
      %s20 = ssub.s32 %s14, 2
      %s21 = sadd.s32 %s14, 1
      %s22 = ssub.s32 %s14, %s21
      %p23 = scmp.eq.s32.totalorder %s22, 0
      %s25 = sadd.s32 %s24, 1
      %s26 = scalar_select %p23, %s24, %s25
      %p29 = pneg %p23
      %p30 = scmp.eq.s32.totalorder %s14, 1
      %p31 = por %p29, %p30
      %p32 = scmp.ne.s32.totalorder %s24, %s27
      %p33 = scmp.eq.s32.totalorder %s14, 0
      %p34 = por %p32, %p33
      %p35 = scmp.ne.s32.totalorder %s24, %s27
      %p36 = scmp.eq.s32.totalorder %s19, 1
      %p37 = por %p35, %p36
      %p38 = scmp.ne.s32.totalorder %s27, %s28
      %p39 = scmp.eq.s32.totalorder %s19, 0
      %p40 = por %p38, %p39
      %p41 = scmp.ne.s32.totalorder %s27, %s28
      %p42 = scmp.eq.s32.totalorder %s20, 1
      %p43 = por %p41, %p42
      %p45 = scmp.ne.s32.totalorder %s28, %s44
      %p46 = scmp.eq.s32.totalorder %s20, 0
      %p47 = por %p45, %p46
      %s49 = sadd.s32 %s48, 1
      %p52 = scmp.eq.s32.totalorder %s14, 1
      %p53 = scmp.ne.s32.totalorder %s48, %s50
      %p54 = scmp.eq.s32.totalorder %s14, 0
      %p55 = por %p53, %p54
      %p56 = scmp.ne.s32.totalorder %s48, %s50
      %p57 = scmp.eq.s32.totalorder %s19, 1
      %p58 = por %p56, %p57
      %p59 = scmp.ne.s32.totalorder %s50, %s51
      %p60 = scmp.eq.s32.totalorder %s19, 0
      %p61 = por %p59, %p60
      %p62 = scmp.ne.s32.totalorder %s50, %s51
      %p63 = scmp.eq.s32.totalorder %s20, 1
      %p64 = por %p62, %p63
      %p66 = scmp.ne.s32.totalorder %s51, %s65
      %p67 = scmp.eq.s32.totalorder %s20, 0
      %p68 = por %p66, %p67
      %s70 = sadd.s32 %s69, 1
      %p73 = scmp.eq.s32.totalorder %s14, 1
      %p74 = scmp.ne.s32.totalorder %s69, %s71
      %p75 = scmp.eq.s32.totalorder %s14, 0
      %p76 = por %p74, %p75
      %p77 = scmp.ne.s32.totalorder %s69, %s71
      %p78 = scmp.eq.s32.totalorder %s19, 1
      %p79 = por %p77, %p78
      %p80 = scmp.ne.s32.totalorder %s71, %s72
      %p81 = scmp.eq.s32.totalorder %s19, 0
      %p82 = por %p80, %p81
      %p83 = scmp.ne.s32.totalorder %s71, %s72
      %p84 = scmp.eq.s32.totalorder %s20, 1
      %p85 = por %p83, %p84
      %p87 = scmp.ne.s32.totalorder %s72, %s86
      %p88 = scmp.eq.s32.totalorder %s20, 0
      %p89 = por %p87, %p88
      %s91 = sadd.s32 %s90, 1
      %p94 = scmp.eq.s32.totalorder %s14, 1
      %p95 = scmp.ne.s32.totalorder %s90, %s92
      %p96 = scmp.eq.s32.totalorder %s14, 0
      %p97 = por %p95, %p96
      %p98 = scmp.ne.s32.totalorder %s90, %s92
      %p99 = scmp.eq.s32.totalorder %s19, 1
      %p100 = por %p98, %p99
      %p101 = scmp.ne.s32.totalorder %s92, %s93
      %p102 = scmp.eq.s32.totalorder %s19, 0
      %p103 = por %p101, %p102
      %p104 = scmp.ne.s32.totalorder %s92, %s93
      %p105 = scmp.eq.s32.totalorder %s20, 1
      %p106 = por %p104, %p105
      %p108 = scmp.ne.s32.totalorder %s93, %s107
      %p109 = scmp.eq.s32.totalorder %s20, 0
      %p110 = por %p108, %p109
      %s112 = sadd.s32 %s111, 1
      %p115 = scmp.eq.s32.totalorder %s14, 1
      %p116 = scmp.ne.s32.totalorder %s111, %s113
      %p117 = scmp.eq.s32.totalorder %s14, 0
      %p118 = por %p116, %p117
      %p119 = scmp.ne.s32.totalorder %s111, %s113
      %p120 = scmp.eq.s32.totalorder %s19, 1
      %p121 = por %p119, %p120
      %p122 = scmp.ne.s32.totalorder %s113, %s114
      %p123 = scmp.eq.s32.totalorder %s19, 0
      %p124 = por %p122, %p123
      %p125 = scmp.ne.s32.totalorder %s113, %s114
      %p126 = scmp.eq.s32.totalorder %s20, 1
      %p127 = por %p125, %p126
      %p129 = scmp.ne.s32.totalorder %s114, %s128
      %p130 = scmp.eq.s32.totalorder %s20, 0
      %p131 = por %p129, %p130
      %s132 = ssub.s32 %s14, %s21
      %p133 = scmp.eq.s32.totalorder %s132, 0
      %s135 = sadd.s32 %s134, 1
      %s136 = scalar_select %p133, %s134, %s135
      %p139 = pneg %p133
      %p140 = scmp.eq.s32.totalorder %s14, 1
      %p141 = por %p139, %p140
      %p142 = scmp.ne.s32.totalorder %s134, %s137
      %p143 = scmp.eq.s32.totalorder %s14, 0
      %p144 = por %p142, %p143
      %p145 = scmp.ne.s32.totalorder %s134, %s137
      %p146 = scmp.eq.s32.totalorder %s19, 1
      %p147 = por %p145, %p146
      %p148 = scmp.ne.s32.totalorder %s137, %s138
      %p149 = scmp.eq.s32.totalorder %s19, 0
      %p150 = por %p148, %p149
      %p151 = scmp.ne.s32.totalorder %s137, %s138
      %p152 = scmp.eq.s32.totalorder %s20, 1
      %p153 = por %p151, %p152
      %p155 = scmp.ne.s32.totalorder %s138, %s154
      %p156 = scmp.eq.s32.totalorder %s20, 0
      %p157 = por %p155, %p156
      %p158 = scmp.le.s32.totalorder 1, %s14
      %p159 = scmp.lt.s32.totalorder %s14, 3
      %p160 = pnand %p158, %p159
      %p161 = pneg %p160
      // Predicated region
      $region9: #{tpu_custom_call.1} parent=5 // pred_check
        _
      $region10: #{tpu_custom_call.1} parent=5 // pred_check_branch
        %163 = sbr.rel (%p160) target = $region12
      $region11: #{tpu_custom_call.1} parent=5 // pred_region
        %s164 = ssub.s32 %s14, 1
        // Predicated region
        $region13: #{tpu_custom_call.1} parent=11 // pred_check
          %p165 = pneg %p61
        $region14: #{tpu_custom_call.1} parent=11 // pred_check_branch
          %167 = sbr.rel (%p165) target = $region16
        $region15: #{tpu_custom_call.1} parent=11 // pred_region
          _
        $region16: #{tpu_custom_call.1} parent=11 // pred_fallthru
          _
        // Predicated region
        $region17: #{tpu_custom_call.1} parent=11 // pred_check
          %p168 = pneg %p82
        $region18: #{tpu_custom_call.1} parent=11 // pred_check_branch
          %170 = sbr.rel (%p168) target = $region20
        $region19: #{tpu_custom_call.1} parent=11 // pred_region
          _
        $region20: #{tpu_custom_call.1} parent=11 // pred_fallthru
          _
        // Predicated region
        $region21: #{tpu_custom_call.1} parent=11 // pred_check
          %p171 = pneg %p103
        $region22: #{tpu_custom_call.1} parent=11 // pred_check_branch
          %173 = sbr.rel (%p171) target = $region24
        $region23: #{tpu_custom_call.1} parent=11 // pred_region
          _
        $region24: #{tpu_custom_call.1} parent=11 // pred_fallthru
          _
        // Predicated region
        $region25: #{tpu_custom_call.1} parent=11 // pred_check
          %p174 = pneg %p124
        $region26: #{tpu_custom_call.1} parent=11 // pred_check_branch
          %176 = sbr.rel (%p174) target = $region28
        $region27: #{tpu_custom_call.1} parent=11 // pred_region
          _
        $region28: #{tpu_custom_call.1} parent=11 // pred_fallthru
          _
      $region12: #{tpu_custom_call.1} parent=5 // pred_fallthru
        _
      %p177 = scmp.lt.s32.totalorder %s14, 2
      // Predicated region
      $region29: #{tpu_custom_call.1} parent=5 // pred_check
        %p178 = pneg %p177
      $region30: #{tpu_custom_call.1} parent=5 // pred_check_branch
        %180 = sbr.rel (%p178) target = $region32
      $region31: #{tpu_custom_call.1} parent=5 // pred_region
        // Predicated region
        $region33: #{tpu_custom_call.1} parent=31 // pred_check
          %p181 = pneg %p34
        $region34: #{tpu_custom_call.1} parent=31 // pred_check_branch
          %183 = sbr.rel (%p181) target = $region36
        $region35: #{tpu_custom_call.1} parent=31 // pred_region
          %s184 = smul.u32 2, %s14
          %p185 = scmp.lt.s32.totalorder %s184, 3
          %s186 = scalar_select %p185, %s184, 3
          %s187 = smul.addr %s186, 8
          %s188 = scalar_lea.vmem %s0, %s187
          %s189 = smul.u32 2, %s14
        $region36: #{tpu_custom_call.1} parent=31 // pred_fallthru
          _
      $region32: #{tpu_custom_call.1} parent=5 // pred_fallthru
        _
      %p190 = scmp.le.s32.totalorder 1, %s14
      %p191 = scmp.lt.s32.totalorder %s14, 3
      %p192 = pnand %p190, %p191
      %p193 = pneg %p192
      // Predicated region
      $region37: #{tpu_custom_call.1} parent=5 // pred_check
        _
      $region38: #{tpu_custom_call.1} parent=5 // pred_check_branch
        %195 = sbr.rel (%p192) target = $region40
      $region39: #{tpu_custom_call.1} parent=5 // pred_region
        %s196 = ssub.s32 %s14, 1
        %s197 = smul.u32 2, %s19
        %p198 = scmp.lt.s32.totalorder %s197, 3
        %s199 = scalar_select %p198, %s197, 3
        %s200 = smul.addr %s199, 8
        %s201 = scalar_lea.vmem %s0, %s200
        %p202 = pneg %p40
        %p203 = pneg %p37
        %p204 = pneg %p61
        %p205 = pneg %p58
        %p206 = pneg %p82
        %p207 = pneg %p79
        %p208 = pneg %p103
        %p209 = pneg %p100
        %p210 = pneg %p124
        %p211 = pneg %p121
        %p212 = pneg %p150
        %p213 = pneg %p147
        %s214 = sand.u32 %s137, 1
        %s215 = scalar_lea.sflag [#allocation3], %s214
        %s216 = sand.u32 %s137, 1
        %s217 = smul.addr %s216, 16
        %s218 = scalar_lea.vmem [#allocation2], %s217
        %s219 = smul.u32 2, %s19
        %p220 = scmp.lt.s32.totalorder %s219, 3
        %s221 = scalar_select %p220, %s219, 3
        %s222 = smul.addr %s221, 8
        %s223 = scalar_lea.vmem %s0, %s222
        %s224 = smul.u32 2, %s19
        %s225 = smul.u32 2, %s19
        %v226 = vld [vmem:[%s223] sm:$0xff]
        %v227 = vld [vmem:[%s223 + $0x8] sm:$0xff]
        %v228 = vld [vmem:[%s1] sm:$0xff]
        %v229 = vld [vmem:[%s1 + $0x8] sm:$0xff]
        %v230 = vld [vmem:[%s1 + $0x10] sm:$0xff]
        %v231 = vld [vmem:[%s1 + $0x18] sm:$0xff]
        %v232 = vld [vmem:[%s1 + $0x20] sm:$0xff]
        %v233 = vld [vmem:[%s1 + $0x28] sm:$0xff]
        %v234 = vld [vmem:[%s1 + $0x30] sm:$0xff]
        %v235 = vld [vmem:[%s1 + $0x38] sm:$0xff]
        %v236 = vld [vmem:[%s1 + $0x40] sm:$0xff]
        %v237 = vld [vmem:[%s1 + $0x48] sm:$0xff]
        %v238 = vld [vmem:[%s1 + $0x50] sm:$0xff]
        %v239 = vld [vmem:[%s1 + $0x58] sm:$0xff]
        %v240 = vld [vmem:[%s1 + $0x60] sm:$0xff]
        %v241 = vld [vmem:[%s1 + $0x68] sm:$0xff]
        %v242 = vld [vmem:[%s1 + $0x70] sm:$0xff]
        %v243 = vld [vmem:[%s1 + $0x78] sm:$0xff]
        %v244 = vld [vmem:[%s2] sm:$0x1]
        %v246 = vlaneseq
        %v247 = vshrl.u32 %v246, 7
        %v248 = vsub.s32 0, %v247
        %v249 = vrot.slane %v244, %v248
        %251 = vmatprep.subr.mxu0 0.0
        %252 = vmatpush1.msra.mxu0 %v228
        %253 = vmatprep.subr.mxu0 0.0
        %254 = vmatpush1.msra.mxu0 %v229
        %255 = vmatprep.subr.mxu0 0.0
        %256 = vmatpush1.msra.mxu0 %v230
        %257 = vmatprep.subr.mxu0 0.0
        %258 = vmatpush1.msra.mxu0 %v231
        %259 = vmatprep.subr.mxu0 0.0
        %260 = vmatpush1.msra.mxu0 %v232
        %261 = vmatprep.subr.mxu0 0.0
        %262 = vmatpush1.msra.mxu0 %v233
        %263 = vmatprep.subr.mxu0 0.0
        %264 = vmatpush1.msra.mxu0 %v234
        %265 = vmatprep.subr.mxu0 0.0
        %266 = vmatpush1.msra.mxu0 %v235
        %267 = vmatprep.subr.mxu0 0.0
        %268 = vmatpush1.msra.mxu0 %v236
        %269 = vmatprep.subr.mxu0 0.0
        %270 = vmatpush1.msra.mxu0 %v237
        %271 = vmatprep.subr.mxu0 0.0
        %272 = vmatpush1.msra.mxu0 %v238
        %273 = vmatprep.subr.mxu0 0.0
        %274 = vmatpush1.msra.mxu0 %v239
        %275 = vmatprep.subr.mxu0 0.0
        %276 = vmatpush1.msra.mxu0 %v240
        %277 = vmatprep.subr.mxu0 0.0
        %278 = vmatpush1.msra.mxu0 %v241
        %279 = vmatprep.subr.mxu0 0.0
        %280 = vmatpush1.msra.mxu0 %v242
        %281 = vmatprep.subr.mxu0 0.0
        %282 = vmatpush1.msra.mxu0 %v243
        %283 = vmatprep.subr.mxu0 0.0
        %284 = vmatpush1.msra.mxu0 0.0
        %285 = vmatprep.subr.mxu0 0.0
        %286 = vmatpush1.msra.mxu0 0.0
        %287 = vmatprep.subr.mxu0 0.0
        %288 = vmatpush1.msra.mxu0 0.0
        %289 = vmatprep.subr.mxu0 0.0
        %290 = vmatpush1.msra.mxu0 0.0
        %291 = vmatprep.subr.mxu0 0.0
        %292 = vmatpush1.msra.mxu0 0.0
        %293 = vmatprep.subr.mxu0 0.0
        %294 = vmatpush1.msra.mxu0 0.0
        %295 = vmatprep.subr.mxu0 0.0
        %296 = vmatpush1.msra.mxu0 0.0
        %297 = vmatprep.subr.mxu0 0.0
        %298 = vmatpush1.msra.mxu0 0.0
        %299 = vmatprep.subr.mxu0 0.0
        %300 = vmatpush1.msra.mxu0 0.0
        %301 = vmatprep.subr.mxu0 0.0
        %302 = vmatpush1.msra.mxu0 0.0
        %303 = vmatprep.subr.mxu0 0.0
        %304 = vmatpush1.msra.mxu0 0.0
        %305 = vmatprep.subr.mxu0 0.0
        %306 = vmatpush1.msra.mxu0 0.0
        %307 = vmatprep.subr.mxu0 0.0
        %308 = vmatpush1.msra.mxu0 0.0
        %309 = vmatprep.subr.mxu0 0.0
        %310 = vmatpush1.msra.mxu0 0.0
        %311 = vmatprep.subr.mxu0 0.0
        %312 = vmatpush1.msra.mxu0 0.0
        %313 = vmatprep.subr.mxu0 0.0
        %314 = vmatpush1.msra.mxu0 0.0
        %315 = vmatprep.mubr.f32.mxu0 0.0
        %316 = vmatmul.mubr.f32.gmra.mrb[0].mxu0 %v226
        %v317 = vpop.f32.mrb[0].mxu0
        %v318 = vadd.f32 %v249, %v317
        %v319 = vpop.f32.mrb[0].mxu0
        %320 = vmatprep.mubr.f32.mxu0 0.0
        %321 = vmatmul.mubr.f32.gmra.mrb[0].mxu0 %v227
        %v322 = vpop.f32.mrb[0].mxu0
        %v323 = vadd.f32 %v249, %v322
        %v324 = vpop.f32.mrb[0].mxu0
        %325 = vdwg.mxu0
        %328 = vrot.lane.b32.xlu0 %v318, 96
        %v329 = vpop.permute.xlu0 %328
        %330 = vrot.lane.b32.xlu0 %v323, 96
        %v331 = vpop.permute.xlu0 %330
        %vm332 = vcmask 64512
        %v333 = vsel %vm332, %v318, 0
        %v335 = vsel %vm332, %v323, 0
        %v337 = vsel %vm332, %v329, 0
        %v339 = vsel %vm332, %v331, 0
        %341 = vmatprep.subr.mxu0 0.0
        %342 = vmatpush1.xpose.msra.mxu0 %v337
        %343 = vmatprep.subr.mxu0 0.0
        %344 = vmatpush1.xpose.msra.mxu0 %v339
        %345 = vmatprep.subr.mxu0 0.0
        %346 = vmatpush1.xpose.msra.mxu0 0.0
        %347 = vmatprep.subr.mxu0 0.0
        %348 = vmatpush1.xpose.msra.mxu0 0.0
        %349 = vmatprep.subr.mxu0 0.0
        %350 = vmatpush1.xpose.msra.mxu0 0.0
        %351 = vmatprep.subr.mxu0 0.0
        %352 = vmatpush1.xpose.msra.mxu0 0.0
        %353 = vmatprep.subr.mxu0 0.0
        %354 = vmatpush1.xpose.msra.mxu0 0.0
        %355 = vmatprep.subr.mxu0 0.0
        %356 = vmatpush1.xpose.msra.mxu0 0.0
        %357 = vmatprep.subr.mxu0 0.0
        %358 = vmatpush1.xpose.msra.mxu0 0.0
        %359 = vmatprep.subr.mxu0 0.0
        %360 = vmatpush1.xpose.msra.mxu0 0.0
        %361 = vmatprep.subr.mxu0 0.0
        %362 = vmatpush1.xpose.msra.mxu0 0.0
        %363 = vmatprep.subr.mxu0 0.0
        %364 = vmatpush1.xpose.msra.mxu0 0.0
        %365 = vmatprep.subr.mxu0 0.0
        %366 = vmatpush1.xpose.msra.mxu0 0.0
        %367 = vmatprep.subr.mxu0 0.0
        %368 = vmatpush1.xpose.msra.mxu0 0.0
        %369 = vmatprep.subr.mxu0 0.0
        %370 = vmatpush1.xpose.msra.mxu0 0.0
        %371 = vmatprep.subr.mxu0 0.0
        %372 = vmatpush1.xpose.msra.mxu0 0.0
        %373 = vmatprep.subr.mxu0 0.0
        %374 = vmatpush1.xpose.msra.mxu0 0.0
        %375 = vmatprep.subr.mxu0 0.0
        %376 = vmatpush1.xpose.msra.mxu0 0.0
        %377 = vmatprep.subr.mxu0 0.0
        %378 = vmatpush1.xpose.msra.mxu0 0.0
        %379 = vmatprep.subr.mxu0 0.0
        %380 = vmatpush1.xpose.msra.mxu0 0.0
        %381 = vmatprep.subr.mxu0 0.0
        %382 = vmatpush1.xpose.msra.mxu0 0.0
        %383 = vmatprep.subr.mxu0 0.0
        %384 = vmatpush1.xpose.msra.mxu0 0.0
        %385 = vmatprep.subr.mxu0 0.0
        %386 = vmatpush1.xpose.msra.mxu0 0.0
        %387 = vmatprep.subr.mxu0 0.0
        %388 = vmatpush1.xpose.msra.mxu0 0.0
        %389 = vmatprep.subr.mxu0 0.0
        %390 = vmatpush1.xpose.msra.mxu0 0.0
        %391 = vmatprep.subr.mxu0 0.0
        %392 = vmatpush1.xpose.msra.mxu0 0.0
        %393 = vmatprep.subr.mxu0 0.0
        %394 = vmatpush1.xpose.msra.mxu0 0.0
        %395 = vmatprep.subr.mxu0 0.0
        %396 = vmatpush1.xpose.msra.mxu0 0.0
        %397 = vmatprep.subr.mxu0 0.0
        %398 = vmatpush1.xpose.msra.mxu0 0.0
        %399 = vmatprep.subr.mxu0 0.0
        %400 = vmatpush1.xpose.msra.mxu0 0.0
        %401 = vmatprep.subr.mxu0 0.0
        %402 = vmatpush1.xpose.msra.mxu0 0.0
        %403 = vmatprep.subr.mxu0 0.0
        %404 = vmatpush1.xpose.msra.mxu0 0.0
        %405 = vmatprep.mubr.f32.mxu0 0.0
        %406 = vmatmul.mubr.f32.gmra.mrb[0].mxu0 %v333
        %v407 = vpop.f32.mrb[0].mxu0
        %v408 = vadd.f32 0.0, %v407
        %v409 = vpop.f32.mrb[0].mxu0
        %410 = vmatprep.mubr.f32.mxu0 0.0
        %411 = vmatmul.mubr.f32.gmra.mrb[0].mxu0 %v335
        %v412 = vpop.f32.mrb[0].mxu0
        %v413 = vadd.f32 0.0, %v412
        %v414 = vpop.f32.mrb[0].mxu0
        %415 = vdwg.mxu0
        %v416 = vmul.f32 %v408, 0.35355338
        %v417 = vmul.f32 %v413, 0.35355338
        %vm418 = vcmask 130048
        %v419 = vsel %vm418, %v416, -inf
        %420 = vmax.xlane.f32.xlu0 %v419
        %v421 = vpop.xlane.xlu0 %420
        %v422 = vsel %vm418, %v417, -inf
        %423 = vmax.xlane.f32.xlu0 %v422
        %v424 = vpop.xlane.xlu0 %423
        %v425 = vsub.f32 %v416, %v421
        %v426 = vsub.f32 %v417, %v424
        %v427 = vmul.f32 %v425, 1.442695
        %v428 = vpow.pop %v427
        %v429 = vmul.f32 %v426, 1.442695
        %v430 = vpow.pop %v429
        %v431 = vsel %vm418, %v428, 0.0
        %432 = vadd.xlane.f32.xlu0 %v431
        %v433 = vpop.xlane.xlu0 %432
        %v434 = vsel %vm418, %v430, 0.0
        %435 = vadd.xlane.f32.xlu0 %v434
        %v436 = vpop.xlane.xlu0 %435
        %v437 = vrcp.pop %v433
        %v438 = vrcp.pop %v436
        %v439 = vmul.f32 %v428, %v437
        %v440 = vmul.f32 %v430, %v438
        %441 = vrot.lane.b32.xlu0 %v318, 64
        %v442 = vpop.permute.xlu0 %441
        %443 = vrot.lane.b32.xlu0 %v323, 64
        %v444 = vpop.permute.xlu0 %443
        %v448 = vsel %vm418, %v439, 0
        %v451 = vsel %vm418, %v440, 0
        %453 = vmatprep.subr.mxu0 0.0
        %454 = vmatpush1.msra.mxu0 %v442
        %455 = vmatprep.subr.mxu0 0.0
        %456 = vmatpush1.msra.mxu0 %v444
        %457 = vmatprep.subr.mxu0 0.0
        %458 = vmatpush1.msra.mxu0 0.0
        %459 = vmatprep.subr.mxu0 0.0
        %460 = vmatpush1.msra.mxu0 0.0
        %461 = vmatprep.subr.mxu0 0.0
        %462 = vmatpush1.msra.mxu0 0.0
        %463 = vmatprep.subr.mxu0 0.0
        %464 = vmatpush1.msra.mxu0 0.0
        %465 = vmatprep.subr.mxu0 0.0
        %466 = vmatpush1.msra.mxu0 0.0
        %467 = vmatprep.subr.mxu0 0.0
        %468 = vmatpush1.msra.mxu0 0.0
        %469 = vmatprep.subr.mxu0 0.0
        %470 = vmatpush1.msra.mxu0 0.0
        %471 = vmatprep.subr.mxu0 0.0
        %472 = vmatpush1.msra.mxu0 0.0
        %473 = vmatprep.subr.mxu0 0.0
        %474 = vmatpush1.msra.mxu0 0.0
        %475 = vmatprep.subr.mxu0 0.0
        %476 = vmatpush1.msra.mxu0 0.0
        %477 = vmatprep.subr.mxu0 0.0
        %478 = vmatpush1.msra.mxu0 0.0
        %479 = vmatprep.subr.mxu0 0.0
        %480 = vmatpush1.msra.mxu0 0.0
        %481 = vmatprep.subr.mxu0 0.0
        %482 = vmatpush1.msra.mxu0 0.0
        %483 = vmatprep.subr.mxu0 0.0
        %484 = vmatpush1.msra.mxu0 0.0
        %485 = vmatprep.subr.mxu0 0.0
        %486 = vmatpush1.msra.mxu0 0.0
        %487 = vmatprep.subr.mxu0 0.0
        %488 = vmatpush1.msra.mxu0 0.0
        %489 = vmatprep.subr.mxu0 0.0
        %490 = vmatpush1.msra.mxu0 0.0
        %491 = vmatprep.subr.mxu0 0.0
        %492 = vmatpush1.msra.mxu0 0.0
        %493 = vmatprep.subr.mxu0 0.0
        %494 = vmatpush1.msra.mxu0 0.0
        %495 = vmatprep.subr.mxu0 0.0
        %496 = vmatpush1.msra.mxu0 0.0
        %497 = vmatprep.subr.mxu0 0.0
        %498 = vmatpush1.msra.mxu0 0.0
        %499 = vmatprep.subr.mxu0 0.0
        %500 = vmatpush1.msra.mxu0 0.0
        %501 = vmatprep.subr.mxu0 0.0
        %502 = vmatpush1.msra.mxu0 0.0
        %503 = vmatprep.subr.mxu0 0.0
        %504 = vmatpush1.msra.mxu0 0.0
        %505 = vmatprep.subr.mxu0 0.0
        %506 = vmatpush1.msra.mxu0 0.0
        %507 = vmatprep.subr.mxu0 0.0
        %508 = vmatpush1.msra.mxu0 0.0
        %509 = vmatprep.subr.mxu0 0.0
        %510 = vmatpush1.msra.mxu0 0.0
        %511 = vmatprep.subr.mxu0 0.0
        %512 = vmatpush1.msra.mxu0 0.0
        %513 = vmatprep.subr.mxu0 0.0
        %514 = vmatpush1.msra.mxu0 0.0
        %515 = vmatprep.subr.mxu0 0.0
        %516 = vmatpush1.msra.mxu0 0.0
        %517 = vmatprep.mubr.f32.mxu0 0.0
        %518 = vmatmul.mubr.f32.gmra.mrb[0].mxu0 %v448
        %v519 = vpop.f32.mrb[0].mxu0
        %v520 = vadd.f32 0.0, %v519
        %v521 = vpop.f32.mrb[0].mxu0
        %522 = vmatprep.mubr.f32.mxu0 0.0
        %523 = vmatmul.mubr.f32.gmra.mrb[0].mxu0 %v451
        %v524 = vpop.f32.mrb[0].mxu0
        %v525 = vadd.f32 0.0, %v524
        %v526 = vpop.f32.mrb[0].mxu0
        %527 = vdwg.mxu0
        %528 = vrot.lane.b32.xlu0 %v318, 120
        %v529 = vpop.permute.xlu0 %528
        %530 = vrot.lane.b32.xlu0 %v323, 120
        %v531 = vpop.permute.xlu0 %530
        %532 = vrot.lane.b32.xlu0 %v318, 88
        %v533 = vpop.permute.xlu0 %532
        %534 = vrot.lane.b32.xlu0 %v323, 88
        %v535 = vpop.permute.xlu0 %534
        %v536 = vsel %vm332, %v529, 0
        %v538 = vsel %vm332, %v531, 0
        %v540 = vsel %vm332, %v533, 0
        %v542 = vsel %vm332, %v535, 0
        %544 = vmatprep.subr.mxu0 0.0
        %545 = vmatpush1.xpose.msra.mxu0 %v540
        %546 = vmatprep.subr.mxu0 0.0
        %547 = vmatpush1.xpose.msra.mxu0 %v542
        %548 = vmatprep.subr.mxu0 0.0
        %549 = vmatpush1.xpose.msra.mxu0 0.0
        %550 = vmatprep.subr.mxu0 0.0
        %551 = vmatpush1.xpose.msra.mxu0 0.0
        %552 = vmatprep.subr.mxu0 0.0
        %553 = vmatpush1.xpose.msra.mxu0 0.0
        %554 = vmatprep.subr.mxu0 0.0
        %555 = vmatpush1.xpose.msra.mxu0 0.0
        %556 = vmatprep.subr.mxu0 0.0
        %557 = vmatpush1.xpose.msra.mxu0 0.0
        %558 = vmatprep.subr.mxu0 0.0
        %559 = vmatpush1.xpose.msra.mxu0 0.0
        %560 = vmatprep.subr.mxu0 0.0
        %561 = vmatpush1.xpose.msra.mxu0 0.0
        %562 = vmatprep.subr.mxu0 0.0
        %563 = vmatpush1.xpose.msra.mxu0 0.0
        %564 = vmatprep.subr.mxu0 0.0
        %565 = vmatpush1.xpose.msra.mxu0 0.0
        %566 = vmatprep.subr.mxu0 0.0
        %567 = vmatpush1.xpose.msra.mxu0 0.0
        %568 = vmatprep.subr.mxu0 0.0
        %569 = vmatpush1.xpose.msra.mxu0 0.0
        %570 = vmatprep.subr.mxu0 0.0
        %571 = vmatpush1.xpose.msra.mxu0 0.0
        %572 = vmatprep.subr.mxu0 0.0
        %573 = vmatpush1.xpose.msra.mxu0 0.0
        %574 = vmatprep.subr.mxu0 0.0
        %575 = vmatpush1.xpose.msra.mxu0 0.0
        %576 = vmatprep.subr.mxu0 0.0
        %577 = vmatpush1.xpose.msra.mxu0 0.0
        %578 = vmatprep.subr.mxu0 0.0
        %579 = vmatpush1.xpose.msra.mxu0 0.0
        %580 = vmatprep.subr.mxu0 0.0
        %581 = vmatpush1.xpose.msra.mxu0 0.0
        %582 = vmatprep.subr.mxu0 0.0
        %583 = vmatpush1.xpose.msra.mxu0 0.0
        %584 = vmatprep.subr.mxu0 0.0
        %585 = vmatpush1.xpose.msra.mxu0 0.0
        %586 = vmatprep.subr.mxu0 0.0
        %587 = vmatpush1.xpose.msra.mxu0 0.0
        %588 = vmatprep.subr.mxu0 0.0
        %589 = vmatpush1.xpose.msra.mxu0 0.0
        %590 = vmatprep.subr.mxu0 0.0
        %591 = vmatpush1.xpose.msra.mxu0 0.0
        %592 = vmatprep.subr.mxu0 0.0
        %593 = vmatpush1.xpose.msra.mxu0 0.0
        %594 = vmatprep.subr.mxu0 0.0
        %595 = vmatpush1.xpose.msra.mxu0 0.0
        %596 = vmatprep.subr.mxu0 0.0
        %597 = vmatpush1.xpose.msra.mxu0 0.0
        %598 = vmatprep.subr.mxu0 0.0
        %599 = vmatpush1.xpose.msra.mxu0 0.0
        %600 = vmatprep.subr.mxu0 0.0
        %601 = vmatpush1.xpose.msra.mxu0 0.0
        %602 = vmatprep.subr.mxu0 0.0
        %603 = vmatpush1.xpose.msra.mxu0 0.0
        %604 = vmatprep.subr.mxu0 0.0
        %605 = vmatpush1.xpose.msra.mxu0 0.0
        %606 = vmatprep.subr.mxu0 0.0
        %607 = vmatpush1.xpose.msra.mxu0 0.0
        %608 = vmatprep.mubr.f32.mxu0 0.0
        %609 = vmatmul.mubr.f32.gmra.mrb[0].mxu0 %v536
        %v610 = vpop.f32.mrb[0].mxu0
        %v611 = vadd.f32 0.0, %v610
        %v612 = vpop.f32.mrb[0].mxu0
        %613 = vmatprep.mubr.f32.mxu0 0.0
        %614 = vmatmul.mubr.f32.gmra.mrb[0].mxu0 %v538
        %v615 = vpop.f32.mrb[0].mxu0
        %v616 = vadd.f32 0.0, %v615
        %v617 = vpop.f32.mrb[0].mxu0
        %618 = vdwg.mxu0
        %v619 = vmul.f32 %v611, 0.35355338
        %v620 = vmul.f32 %v616, 0.35355338
        %v621 = vsel %vm418, %v619, -inf
        %622 = vmax.xlane.f32.xlu0 %v621
        %v623 = vpop.xlane.xlu0 %622
        %v624 = vsel %vm418, %v620, -inf
        %625 = vmax.xlane.f32.xlu0 %v624
        %v626 = vpop.xlane.xlu0 %625
        %v627 = vsub.f32 %v619, %v623
        %v628 = vsub.f32 %v620, %v626
        %v629 = vmul.f32 %v627, 1.442695
        %v630 = vpow.pop %v629
        %v631 = vmul.f32 %v628, 1.442695
        %v632 = vpow.pop %v631
        %v633 = vsel %vm418, %v630, 0.0
        %634 = vadd.xlane.f32.xlu0 %v633
        %v635 = vpop.xlane.xlu0 %634
        %v636 = vsel %vm418, %v632, 0.0
        %637 = vadd.xlane.f32.xlu0 %v636
        %v638 = vpop.xlane.xlu0 %637
        %v639 = vrcp.pop %v635
        %v640 = vrcp.pop %v638
        %v641 = vmul.f32 %v630, %v639
        %v642 = vmul.f32 %v632, %v640
        %643 = vrot.lane.b32.xlu0 %v318, 56
        %v644 = vpop.permute.xlu0 %643
        %645 = vrot.lane.b32.xlu0 %v323, 56
        %v646 = vpop.permute.xlu0 %645
        %v650 = vsel %vm418, %v641, 0
        %v653 = vsel %vm418, %v642, 0
        %655 = vmatprep.subr.mxu0 0.0
        %656 = vmatpush1.msra.mxu0 %v644
        %657 = vmatprep.subr.mxu0 0.0
        %658 = vmatpush1.msra.mxu0 %v646
        %659 = vmatprep.subr.mxu0 0.0
        %660 = vmatpush1.msra.mxu0 0.0
        %661 = vmatprep.subr.mxu0 0.0
        %662 = vmatpush1.msra.mxu0 0.0
        %663 = vmatprep.subr.mxu0 0.0
        %664 = vmatpush1.msra.mxu0 0.0
        %665 = vmatprep.subr.mxu0 0.0
        %666 = vmatpush1.msra.mxu0 0.0
        %667 = vmatprep.subr.mxu0 0.0
        %668 = vmatpush1.msra.mxu0 0.0
        %669 = vmatprep.subr.mxu0 0.0
        %670 = vmatpush1.msra.mxu0 0.0
        %671 = vmatprep.subr.mxu0 0.0
        %672 = vmatpush1.msra.mxu0 0.0
        %673 = vmatprep.subr.mxu0 0.0
        %674 = vmatpush1.msra.mxu0 0.0
        %675 = vmatprep.subr.mxu0 0.0
        %676 = vmatpush1.msra.mxu0 0.0
        %677 = vmatprep.subr.mxu0 0.0
        %678 = vmatpush1.msra.mxu0 0.0
        %679 = vmatprep.subr.mxu0 0.0
        %680 = vmatpush1.msra.mxu0 0.0
        %681 = vmatprep.subr.mxu0 0.0
        %682 = vmatpush1.msra.mxu0 0.0
        %683 = vmatprep.subr.mxu0 0.0
        %684 = vmatpush1.msra.mxu0 0.0
        %685 = vmatprep.subr.mxu0 0.0
        %686 = vmatpush1.msra.mxu0 0.0
        %687 = vmatprep.subr.mxu0 0.0
        %688 = vmatpush1.msra.mxu0 0.0
        %689 = vmatprep.subr.mxu0 0.0
        %690 = vmatpush1.msra.mxu0 0.0
        %691 = vmatprep.subr.mxu0 0.0
        %692 = vmatpush1.msra.mxu0 0.0
        %693 = vmatprep.subr.mxu0 0.0
        %694 = vmatpush1.msra.mxu0 0.0
        %695 = vmatprep.subr.mxu0 0.0
        %696 = vmatpush1.msra.mxu0 0.0
        %697 = vmatprep.subr.mxu0 0.0
        %698 = vmatpush1.msra.mxu0 0.0
        %699 = vmatprep.subr.mxu0 0.0
        %700 = vmatpush1.msra.mxu0 0.0
        %701 = vmatprep.subr.mxu0 0.0
        %702 = vmatpush1.msra.mxu0 0.0
        %703 = vmatprep.subr.mxu0 0.0
        %704 = vmatpush1.msra.mxu0 0.0
        %705 = vmatprep.subr.mxu0 0.0
        %706 = vmatpush1.msra.mxu0 0.0
        %707 = vmatprep.subr.mxu0 0.0
        %708 = vmatpush1.msra.mxu0 0.0
        %709 = vmatprep.subr.mxu0 0.0
        %710 = vmatpush1.msra.mxu0 0.0
        %711 = vmatprep.subr.mxu0 0.0
        %712 = vmatpush1.msra.mxu0 0.0
        %713 = vmatprep.subr.mxu0 0.0
        %714 = vmatpush1.msra.mxu0 0.0
        %715 = vmatprep.subr.mxu0 0.0
        %716 = vmatpush1.msra.mxu0 0.0
        %717 = vmatprep.subr.mxu0 0.0
        %718 = vmatpush1.msra.mxu0 0.0
        %719 = vmatprep.mubr.f32.mxu0 0.0
        %720 = vmatmul.mubr.f32.gmra.mrb[0].mxu0 %v650
        %v721 = vpop.f32.mrb[0].mxu0
        %v722 = vadd.f32 0.0, %v721
        %v723 = vpop.f32.mrb[0].mxu0
        %724 = vmatprep.mubr.f32.mxu0 0.0
        %725 = vmatmul.mubr.f32.gmra.mrb[0].mxu0 %v653
        %v726 = vpop.f32.mrb[0].mxu0
        %v727 = vadd.f32 0.0, %v726
        %v728 = vpop.f32.mrb[0].mxu0
        %729 = vdwg.mxu0
        %730 = vrot.lane.b32.xlu0 %v318, 112
        %v731 = vpop.permute.xlu0 %730
        %732 = vrot.lane.b32.xlu0 %v323, 112
        %v733 = vpop.permute.xlu0 %732
        %734 = vrot.lane.b32.xlu0 %v318, 80
        %v735 = vpop.permute.xlu0 %734
        %736 = vrot.lane.b32.xlu0 %v323, 80
        %v737 = vpop.permute.xlu0 %736
        %v738 = vsel %vm332, %v731, 0
        %v740 = vsel %vm332, %v733, 0
        %v742 = vsel %vm332, %v735, 0
        %v744 = vsel %vm332, %v737, 0
        %746 = vmatprep.subr.mxu0 0.0
        %747 = vmatpush1.xpose.msra.mxu0 %v742
        %748 = vmatprep.subr.mxu0 0.0
        %749 = vmatpush1.xpose.msra.mxu0 %v744
        %750 = vmatprep.subr.mxu0 0.0
        %751 = vmatpush1.xpose.msra.mxu0 0.0
        %752 = vmatprep.subr.mxu0 0.0
        %753 = vmatpush1.xpose.msra.mxu0 0.0
        %754 = vmatprep.subr.mxu0 0.0
        %755 = vmatpush1.xpose.msra.mxu0 0.0
        %756 = vmatprep.subr.mxu0 0.0
        %757 = vmatpush1.xpose.msra.mxu0 0.0
        %758 = vmatprep.subr.mxu0 0.0
        %759 = vmatpush1.xpose.msra.mxu0 0.0
        %760 = vmatprep.subr.mxu0 0.0
        %761 = vmatpush1.xpose.msra.mxu0 0.0
        %762 = vmatprep.subr.mxu0 0.0
        %763 = vmatpush1.xpose.msra.mxu0 0.0
        %764 = vmatprep.subr.mxu0 0.0
        %765 = vmatpush1.xpose.msra.mxu0 0.0
        %766 = vmatprep.subr.mxu0 0.0
        %767 = vmatpush1.xpose.msra.mxu0 0.0
        %768 = vmatprep.subr.mxu0 0.0
        %769 = vmatpush1.xpose.msra.mxu0 0.0
        %770 = vmatprep.subr.mxu0 0.0
        %771 = vmatpush1.xpose.msra.mxu0 0.0
        %772 = vmatprep.subr.mxu0 0.0
        %773 = vmatpush1.xpose.msra.mxu0 0.0
        %774 = vmatprep.subr.mxu0 0.0
        %775 = vmatpush1.xpose.msra.mxu0 0.0
        %776 = vmatprep.subr.mxu0 0.0
        %777 = vmatpush1.xpose.msra.mxu0 0.0
        %778 = vmatprep.subr.mxu0 0.0
        %779 = vmatpush1.xpose.msra.mxu0 0.0
        %780 = vmatprep.subr.mxu0 0.0
        %781 = vmatpush1.xpose.msra.mxu0 0.0
        %782 = vmatprep.subr.mxu0 0.0
        %783 = vmatpush1.xpose.msra.mxu0 0.0
        %784 = vmatprep.subr.mxu0 0.0
        %785 = vmatpush1.xpose.msra.mxu0 0.0
        %786 = vmatprep.subr.mxu0 0.0
        %787 = vmatpush1.xpose.msra.mxu0 0.0
        %788 = vmatprep.subr.mxu0 0.0
        %789 = vmatpush1.xpose.msra.mxu0 0.0
        %790 = vmatprep.subr.mxu0 0.0
        %791 = vmatpush1.xpose.msra.mxu0 0.0
        %792 = vmatprep.subr.mxu0 0.0
        %793 = vmatpush1.xpose.msra.mxu0 0.0
        %794 = vmatprep.subr.mxu0 0.0
        %795 = vmatpush1.xpose.msra.mxu0 0.0
        %796 = vmatprep.subr.mxu0 0.0
        %797 = vmatpush1.xpose.msra.mxu0 0.0
        %798 = vmatprep.subr.mxu0 0.0
        %799 = vmatpush1.xpose.msra.mxu0 0.0
        %800 = vmatprep.subr.mxu0 0.0
        %801 = vmatpush1.xpose.msra.mxu0 0.0
        %802 = vmatprep.subr.mxu0 0.0
        %803 = vmatpush1.xpose.msra.mxu0 0.0
        %804 = vmatprep.subr.mxu0 0.0
        %805 = vmatpush1.xpose.msra.mxu0 0.0
        %806 = vmatprep.subr.mxu0 0.0
        %807 = vmatpush1.xpose.msra.mxu0 0.0
        %808 = vmatprep.subr.mxu0 0.0
        %809 = vmatpush1.xpose.msra.mxu0 0.0
        %810 = vmatprep.mubr.f32.mxu0 0.0
        %811 = vmatmul.mubr.f32.gmra.mrb[0].mxu0 %v738
        %v812 = vpop.f32.mrb[0].mxu0
        %v813 = vadd.f32 0.0, %v812
        %v814 = vpop.f32.mrb[0].mxu0
        %815 = vmatprep.mubr.f32.mxu0 0.0
        %816 = vmatmul.mubr.f32.gmra.mrb[0].mxu0 %v740
        %v817 = vpop.f32.mrb[0].mxu0
        %v818 = vadd.f32 0.0, %v817
        %v819 = vpop.f32.mrb[0].mxu0
        %820 = vdwg.mxu0
        %v821 = vmul.f32 %v813, 0.35355338
        %v822 = vmul.f32 %v818, 0.35355338
        %v823 = vsel %vm418, %v821, -inf
        %824 = vmax.xlane.f32.xlu0 %v823
        %v825 = vpop.xlane.xlu0 %824
        %v826 = vsel %vm418, %v822, -inf
        %827 = vmax.xlane.f32.xlu0 %v826
        %v828 = vpop.xlane.xlu0 %827
        %v829 = vsub.f32 %v821, %v825
        %v830 = vsub.f32 %v822, %v828
        %v831 = vmul.f32 %v829, 1.442695
        %v832 = vpow.pop %v831
        %v833 = vmul.f32 %v830, 1.442695
        %v834 = vpow.pop %v833
        %v835 = vsel %vm418, %v832, 0.0
        %836 = vadd.xlane.f32.xlu0 %v835
        %v837 = vpop.xlane.xlu0 %836
        %v838 = vsel %vm418, %v834, 0.0
        %839 = vadd.xlane.f32.xlu0 %v838
        %v840 = vpop.xlane.xlu0 %839
        %v841 = vrcp.pop %v837
        %v842 = vrcp.pop %v840
        %v843 = vmul.f32 %v832, %v841
        %v844 = vmul.f32 %v834, %v842
        %845 = vrot.lane.b32.xlu0 %v318, 48
        %v846 = vpop.permute.xlu0 %845
        %847 = vrot.lane.b32.xlu0 %v323, 48
        %v848 = vpop.permute.xlu0 %847
        %v852 = vsel %vm418, %v843, 0
        %v855 = vsel %vm418, %v844, 0
        %857 = vmatprep.subr.mxu0 0.0
        %858 = vmatpush1.msra.mxu0 %v846
        %859 = vmatprep.subr.mxu0 0.0
        %860 = vmatpush1.msra.mxu0 %v848
        %861 = vmatprep.subr.mxu0 0.0
        %862 = vmatpush1.msra.mxu0 0.0
        %863 = vmatprep.subr.mxu0 0.0
        %864 = vmatpush1.msra.mxu0 0.0
        %865 = vmatprep.subr.mxu0 0.0
        %866 = vmatpush1.msra.mxu0 0.0
        %867 = vmatprep.subr.mxu0 0.0
        %868 = vmatpush1.msra.mxu0 0.0
        %869 = vmatprep.subr.mxu0 0.0
        %870 = vmatpush1.msra.mxu0 0.0
        %871 = vmatprep.subr.mxu0 0.0
        %872 = vmatpush1.msra.mxu0 0.0
        %873 = vmatprep.subr.mxu0 0.0
        %874 = vmatpush1.msra.mxu0 0.0
        %875 = vmatprep.subr.mxu0 0.0
        %876 = vmatpush1.msra.mxu0 0.0
        %877 = vmatprep.subr.mxu0 0.0
        %878 = vmatpush1.msra.mxu0 0.0
        %879 = vmatprep.subr.mxu0 0.0
        %880 = vmatpush1.msra.mxu0 0.0
        %881 = vmatprep.subr.mxu0 0.0
        %882 = vmatpush1.msra.mxu0 0.0
        %883 = vmatprep.subr.mxu0 0.0
        %884 = vmatpush1.msra.mxu0 0.0
        %885 = vmatprep.subr.mxu0 0.0
        %886 = vmatpush1.msra.mxu0 0.0
        %887 = vmatprep.subr.mxu0 0.0
        %888 = vmatpush1.msra.mxu0 0.0
        %889 = vmatprep.subr.mxu0 0.0
        %890 = vmatpush1.msra.mxu0 0.0
        %891 = vmatprep.subr.mxu0 0.0
        %892 = vmatpush1.msra.mxu0 0.0
        %893 = vmatprep.subr.mxu0 0.0
        %894 = vmatpush1.msra.mxu0 0.0
        %895 = vmatprep.subr.mxu0 0.0
        %896 = vmatpush1.msra.mxu0 0.0
        %897 = vmatprep.subr.mxu0 0.0
        %898 = vmatpush1.msra.mxu0 0.0
        %899 = vmatprep.subr.mxu0 0.0
        %900 = vmatpush1.msra.mxu0 0.0
        %901 = vmatprep.subr.mxu0 0.0
        %902 = vmatpush1.msra.mxu0 0.0
        %903 = vmatprep.subr.mxu0 0.0
        %904 = vmatpush1.msra.mxu0 0.0
        %905 = vmatprep.subr.mxu0 0.0
        %906 = vmatpush1.msra.mxu0 0.0
        %907 = vmatprep.subr.mxu0 0.0
        %908 = vmatpush1.msra.mxu0 0.0
        %909 = vmatprep.subr.mxu0 0.0
        %910 = vmatpush1.msra.mxu0 0.0
        %911 = vmatprep.subr.mxu0 0.0
        %912 = vmatpush1.msra.mxu0 0.0
        %913 = vmatprep.subr.mxu0 0.0
        %914 = vmatpush1.msra.mxu0 0.0
        %915 = vmatprep.subr.mxu0 0.0
        %916 = vmatpush1.msra.mxu0 0.0
        %917 = vmatprep.subr.mxu0 0.0
        %918 = vmatpush1.msra.mxu0 0.0
        %919 = vmatprep.subr.mxu0 0.0
        %920 = vmatpush1.msra.mxu0 0.0
        %921 = vmatprep.mubr.f32.mxu0 0.0
        %922 = vmatmul.mubr.f32.gmra.mrb[0].mxu0 %v852
        %v923 = vpop.f32.mrb[0].mxu0
        %v924 = vadd.f32 0.0, %v923
        %v925 = vpop.f32.mrb[0].mxu0
        %926 = vmatprep.mubr.f32.mxu0 0.0
        %927 = vmatmul.mubr.f32.gmra.mrb[0].mxu0 %v855
        %v928 = vpop.f32.mrb[0].mxu0
        %v929 = vadd.f32 0.0, %v928
        %v930 = vpop.f32.mrb[0].mxu0
        %931 = vdwg.mxu0
        %932 = vrot.lane.b32.xlu0 %v318, 104
        %v933 = vpop.permute.xlu0 %932
        %934 = vrot.lane.b32.xlu0 %v323, 104
        %v935 = vpop.permute.xlu0 %934
        %936 = vrot.lane.b32.xlu0 %v318, 72
        %v937 = vpop.permute.xlu0 %936
        %938 = vrot.lane.b32.xlu0 %v323, 72
        %v939 = vpop.permute.xlu0 %938
        %v940 = vsel %vm332, %v933, 0
        %v942 = vsel %vm332, %v935, 0
        %v944 = vsel %vm332, %v937, 0
        %v946 = vsel %vm332, %v939, 0
        %948 = vmatprep.subr.mxu0 0.0
        %949 = vmatpush1.xpose.msra.mxu0 %v944
        %950 = vmatprep.subr.mxu0 0.0
        %951 = vmatpush1.xpose.msra.mxu0 %v946
        %952 = vmatprep.subr.mxu0 0.0
        %953 = vmatpush1.xpose.msra.mxu0 0.0
        %954 = vmatprep.subr.mxu0 0.0
        %955 = vmatpush1.xpose.msra.mxu0 0.0
        %956 = vmatprep.subr.mxu0 0.0
        %957 = vmatpush1.xpose.msra.mxu0 0.0
        %958 = vmatprep.subr.mxu0 0.0
        %959 = vmatpush1.xpose.msra.mxu0 0.0
        %960 = vmatprep.subr.mxu0 0.0
        %961 = vmatpush1.xpose.msra.mxu0 0.0
        %962 = vmatprep.subr.mxu0 0.0
        %963 = vmatpush1.xpose.msra.mxu0 0.0
        %964 = vmatprep.subr.mxu0 0.0
        %965 = vmatpush1.xpose.msra.mxu0 0.0
        %966 = vmatprep.subr.mxu0 0.0
        %967 = vmatpush1.xpose.msra.mxu0 0.0
        %968 = vmatprep.subr.mxu0 0.0
        %969 = vmatpush1.xpose.msra.mxu0 0.0
        %970 = vmatprep.subr.mxu0 0.0
        %971 = vmatpush1.xpose.msra.mxu0 0.0
        %972 = vmatprep.subr.mxu0 0.0
        %973 = vmatpush1.xpose.msra.mxu0 0.0
        %974 = vmatprep.subr.mxu0 0.0
        %975 = vmatpush1.xpose.msra.mxu0 0.0
        %976 = vmatprep.subr.mxu0 0.0
        %977 = vmatpush1.xpose.msra.mxu0 0.0
        %978 = vmatprep.subr.mxu0 0.0
        %979 = vmatpush1.xpose.msra.mxu0 0.0
        %980 = vmatprep.subr.mxu0 0.0
        %981 = vmatpush1.xpose.msra.mxu0 0.0
        %982 = vmatprep.subr.mxu0 0.0
        %983 = vmatpush1.xpose.msra.mxu0 0.0
        %984 = vmatprep.subr.mxu0 0.0
        %985 = vmatpush1.xpose.msra.mxu0 0.0
        %986 = vmatprep.subr.mxu0 0.0
        %987 = vmatpush1.xpose.msra.mxu0 0.0
        %988 = vmatprep.subr.mxu0 0.0
        %989 = vmatpush1.xpose.msra.mxu0 0.0
        %990 = vmatprep.subr.mxu0 0.0
        %991 = vmatpush1.xpose.msra.mxu0 0.0
        %992 = vmatprep.subr.mxu0 0.0
        %993 = vmatpush1.xpose.msra.mxu0 0.0
        %994 = vmatprep.subr.mxu0 0.0
        %995 = vmatpush1.xpose.msra.mxu0 0.0
        %996 = vmatprep.subr.mxu0 0.0
        %997 = vmatpush1.xpose.msra.mxu0 0.0
        %998 = vmatprep.subr.mxu0 0.0
        %999 = vmatpush1.xpose.msra.mxu0 0.0
        %1000 = vmatprep.subr.mxu0 0.0
        %1001 = vmatpush1.xpose.msra.mxu0 0.0
        %1002 = vmatprep.subr.mxu0 0.0
        %1003 = vmatpush1.xpose.msra.mxu0 0.0
        %1004 = vmatprep.subr.mxu0 0.0
        %1005 = vmatpush1.xpose.msra.mxu0 0.0
        %1006 = vmatprep.subr.mxu0 0.0
        %1007 = vmatpush1.xpose.msra.mxu0 0.0
        %1008 = vmatprep.subr.mxu0 0.0
        %1009 = vmatpush1.xpose.msra.mxu0 0.0
        %1010 = vmatprep.subr.mxu0 0.0
        %1011 = vmatpush1.xpose.msra.mxu0 0.0
        %1012 = vmatprep.mubr.f32.mxu0 0.0
        %1013 = vmatmul.mubr.f32.gmra.mrb[0].mxu0 %v940
        %v1014 = vpop.f32.mrb[0].mxu0
        %v1015 = vadd.f32 0.0, %v1014
        %v1016 = vpop.f32.mrb[0].mxu0
        %1017 = vmatprep.mubr.f32.mxu0 0.0
        %1018 = vmatmul.mubr.f32.gmra.mrb[0].mxu0 %v942
        %v1019 = vpop.f32.mrb[0].mxu0
        %v1020 = vadd.f32 0.0, %v1019
        %v1021 = vpop.f32.mrb[0].mxu0
        %1022 = vdwg.mxu0
        %v1023 = vmul.f32 %v1015, 0.35355338
        %v1024 = vmul.f32 %v1020, 0.35355338
        %v1025 = vsel %vm418, %v1023, -inf
        %1026 = vmax.xlane.f32.xlu0 %v1025
        %v1027 = vpop.xlane.xlu0 %1026
        %v1028 = vsel %vm418, %v1024, -inf
        %1029 = vmax.xlane.f32.xlu0 %v1028
        %v1030 = vpop.xlane.xlu0 %1029
        %v1031 = vsub.f32 %v1023, %v1027
        %v1032 = vsub.f32 %v1024, %v1030
        %v1033 = vmul.f32 %v1031, 1.442695
        %v1034 = vpow.pop %v1033
        %v1035 = vmul.f32 %v1032, 1.442695
        %v1036 = vpow.pop %v1035
        %v1037 = vsel %vm418, %v1034, 0.0
        %1038 = vadd.xlane.f32.xlu0 %v1037
        %v1039 = vpop.xlane.xlu0 %1038
        %v1040 = vsel %vm418, %v1036, 0.0
        %1041 = vadd.xlane.f32.xlu0 %v1040
        %v1042 = vpop.xlane.xlu0 %1041
        %v1043 = vrcp.pop %v1039
        %v1044 = vrcp.pop %v1042
        %v1045 = vmul.f32 %v1034, %v1043
        %v1046 = vmul.f32 %v1036, %v1044
        %1047 = vrot.lane.b32.xlu0 %v318, 40
        %v1048 = vpop.permute.xlu0 %1047
        %1049 = vrot.lane.b32.xlu0 %v323, 40
        %v1050 = vpop.permute.xlu0 %1049
        %v1054 = vsel %vm418, %v1045, 0
        %v1057 = vsel %vm418, %v1046, 0
        %1059 = vmatprep.subr.mxu0 0.0
        %1060 = vmatpush1.msra.mxu0 %v1048
        %1061 = vmatprep.subr.mxu0 0.0
        %1062 = vmatpush1.msra.mxu0 %v1050
        %1063 = vmatprep.subr.mxu0 0.0
        %1064 = vmatpush1.msra.mxu0 0.0
        %1065 = vmatprep.subr.mxu0 0.0
        %1066 = vmatpush1.msra.mxu0 0.0
        %1067 = vmatprep.subr.mxu0 0.0
        %1068 = vmatpush1.msra.mxu0 0.0
        %1069 = vmatprep.subr.mxu0 0.0
        %1070 = vmatpush1.msra.mxu0 0.0
        %1071 = vmatprep.subr.mxu0 0.0
        %1072 = vmatpush1.msra.mxu0 0.0
        %1073 = vmatprep.subr.mxu0 0.0
        %1074 = vmatpush1.msra.mxu0 0.0
        %1075 = vmatprep.subr.mxu0 0.0
        %1076 = vmatpush1.msra.mxu0 0.0
        %1077 = vmatprep.subr.mxu0 0.0
        %1078 = vmatpush1.msra.mxu0 0.0
        %1079 = vmatprep.subr.mxu0 0.0
        %1080 = vmatpush1.msra.mxu0 0.0
        %1081 = vmatprep.subr.mxu0 0.0
        %1082 = vmatpush1.msra.mxu0 0.0
        %1083 = vmatprep.subr.mxu0 0.0
        %1084 = vmatpush1.msra.mxu0 0.0
        %1085 = vmatprep.subr.mxu0 0.0
        %1086 = vmatpush1.msra.mxu0 0.0
        %1087 = vmatprep.subr.mxu0 0.0
        %1088 = vmatpush1.msra.mxu0 0.0
        %1089 = vmatprep.subr.mxu0 0.0
        %1090 = vmatpush1.msra.mxu0 0.0
        %1091 = vmatprep.subr.mxu0 0.0
        %1092 = vmatpush1.msra.mxu0 0.0
        %1093 = vmatprep.subr.mxu0 0.0
        %1094 = vmatpush1.msra.mxu0 0.0
        %1095 = vmatprep.subr.mxu0 0.0
        %1096 = vmatpush1.msra.mxu0 0.0
        %1097 = vmatprep.subr.mxu0 0.0
        %1098 = vmatpush1.msra.mxu0 0.0
        %1099 = vmatprep.subr.mxu0 0.0
        %1100 = vmatpush1.msra.mxu0 0.0
        %1101 = vmatprep.subr.mxu0 0.0
        %1102 = vmatpush1.msra.mxu0 0.0
        %1103 = vmatprep.subr.mxu0 0.0
        %1104 = vmatpush1.msra.mxu0 0.0
        %1105 = vmatprep.subr.mxu0 0.0
        %1106 = vmatpush1.msra.mxu0 0.0
        %1107 = vmatprep.subr.mxu0 0.0
        %1108 = vmatpush1.msra.mxu0 0.0
        %1109 = vmatprep.subr.mxu0 0.0
        %1110 = vmatpush1.msra.mxu0 0.0
        %1111 = vmatprep.subr.mxu0 0.0
        %1112 = vmatpush1.msra.mxu0 0.0
        %1113 = vmatprep.subr.mxu0 0.0
        %1114 = vmatpush1.msra.mxu0 0.0
        %1115 = vmatprep.subr.mxu0 0.0
        %1116 = vmatpush1.msra.mxu0 0.0
        %1117 = vmatprep.subr.mxu0 0.0
        %1118 = vmatpush1.msra.mxu0 0.0
        %1119 = vmatprep.subr.mxu0 0.0
        %1120 = vmatpush1.msra.mxu0 0.0
        %1121 = vmatprep.subr.mxu0 0.0
        %1122 = vmatpush1.msra.mxu0 0.0
        %1123 = vmatprep.mubr.f32.mxu0 0.0
        %1124 = vmatmul.mubr.f32.gmra.mrb[0].mxu0 %v1054
        %v1125 = vpop.f32.mrb[0].mxu0
        %v1126 = vadd.f32 0.0, %v1125
        %v1127 = vpop.f32.mrb[0].mxu0
        %1128 = vmatprep.mubr.f32.mxu0 0.0
        %1129 = vmatmul.mubr.f32.gmra.mrb[0].mxu0 %v1057
        %v1130 = vpop.f32.mrb[0].mxu0
        %v1131 = vadd.f32 0.0, %v1130
        %v1132 = vpop.f32.mrb[0].mxu0
        %1133 = vdwg.mxu0
        %1136 = vrot.lane.b32.xlu0 %v722, 8
        %v1137 = vpop.permute.xlu0 %1136
        %1138 = vrot.lane.b32.xlu0 %v727, 8
        %v1139 = vpop.permute.xlu0 %1138
        %1144 = vrot.lane.b32.xlu0 %v924, 16
        %v1145 = vpop.permute.xlu0 %1144
        %1146 = vrot.lane.b32.xlu0 %v929, 16
        %v1147 = vpop.permute.xlu0 %1146
        %1152 = vrot.lane.b32.xlu0 %v1126, 24
        %v1153 = vpop.permute.xlu0 %1152
        %1154 = vrot.lane.b32.xlu0 %v1131, 24
        %v1155 = vpop.permute.xlu0 %1154
        %v1158 = vsel %vm332, %v520, %v1137
        %v1159 = vsel %vm332, %v525, %v1139
        %v1160 = vsel %vm418, %v1158, %v1145
        %v1161 = vsel %vm418, %v1159, %v1147
        %vm1162 = vcmask 195584
        %v1163 = vsel %vm1162, %v1160, %v1153
        %v1164 = vsel %vm1162, %v1161, %v1155
        %v1165 = vld [vmem:[%s3] sm:$0xff]
        %v1166 = vld [vmem:[%s3 + $0x8] sm:$0xff]
        %v1167 = vld [vmem:[%s3 + $0x10] sm:$0xff]
        %v1168 = vld [vmem:[%s3 + $0x18] sm:$0xff]
        %v1169 = vld [vmem:[%s4] sm:$0x1]
        %v1171 = vlaneseq
        %v1172 = vshrl.u32 %v1171, 7
        %v1173 = vsub.s32 0, %v1172
        %v1174 = vrot.slane %v1169, %v1173
        %vm1176 = vcmask 261120
        %v1178 = vsel %vm1176, %v1163, 0
        %v1181 = vsel %vm1176, %v1164, 0
        %1183 = vmatprep.subr.mxu0 0.0
        %1184 = vmatpush1.msra.mxu0 %v1165
        %1185 = vmatprep.subr.mxu0 0.0
        %1186 = vmatpush1.msra.mxu0 %v1166
        %1187 = vmatprep.subr.mxu0 0.0
        %1188 = vmatpush1.msra.mxu0 %v1167
        %1189 = vmatprep.subr.mxu0 0.0
        %1190 = vmatpush1.msra.mxu0 %v1168
        %1191 = vmatprep.subr.mxu0 0.0
        %1192 = vmatpush1.msra.mxu0 0.0
        %1193 = vmatprep.subr.mxu0 0.0
        %1194 = vmatpush1.msra.mxu0 0.0
        %1195 = vmatprep.subr.mxu0 0.0
        %1196 = vmatpush1.msra.mxu0 0.0
        %1197 = vmatprep.subr.mxu0 0.0
        %1198 = vmatpush1.msra.mxu0 0.0
        %1199 = vmatprep.subr.mxu0 0.0
        %1200 = vmatpush1.msra.mxu0 0.0
        %1201 = vmatprep.subr.mxu0 0.0
        %1202 = vmatpush1.msra.mxu0 0.0
        %1203 = vmatprep.subr.mxu0 0.0
        %1204 = vmatpush1.msra.mxu0 0.0
        %1205 = vmatprep.subr.mxu0 0.0
        %1206 = vmatpush1.msra.mxu0 0.0
        %1207 = vmatprep.subr.mxu0 0.0
        %1208 = vmatpush1.msra.mxu0 0.0
        %1209 = vmatprep.subr.mxu0 0.0
        %1210 = vmatpush1.msra.mxu0 0.0
        %1211 = vmatprep.subr.mxu0 0.0
        %1212 = vmatpush1.msra.mxu0 0.0
        %1213 = vmatprep.subr.mxu0 0.0
        %1214 = vmatpush1.msra.mxu0 0.0
        %1215 = vmatprep.subr.mxu0 0.0
        %1216 = vmatpush1.msra.mxu0 0.0
        %1217 = vmatprep.subr.mxu0 0.0
        %1218 = vmatpush1.msra.mxu0 0.0
        %1219 = vmatprep.subr.mxu0 0.0
        %1220 = vmatpush1.msra.mxu0 0.0
        %1221 = vmatprep.subr.mxu0 0.0
        %1222 = vmatpush1.msra.mxu0 0.0
        %1223 = vmatprep.subr.mxu0 0.0
        %1224 = vmatpush1.msra.mxu0 0.0
        %1225 = vmatprep.subr.mxu0 0.0
        %1226 = vmatpush1.msra.mxu0 0.0
        %1227 = vmatprep.subr.mxu0 0.0
        %1228 = vmatpush1.msra.mxu0 0.0
        %1229 = vmatprep.subr.mxu0 0.0
        %1230 = vmatpush1.msra.mxu0 0.0
        %1231 = vmatprep.subr.mxu0 0.0
        %1232 = vmatpush1.msra.mxu0 0.0
        %1233 = vmatprep.subr.mxu0 0.0
        %1234 = vmatpush1.msra.mxu0 0.0
        %1235 = vmatprep.subr.mxu0 0.0
        %1236 = vmatpush1.msra.mxu0 0.0
        %1237 = vmatprep.subr.mxu0 0.0
        %1238 = vmatpush1.msra.mxu0 0.0
        %1239 = vmatprep.subr.mxu0 0.0
        %1240 = vmatpush1.msra.mxu0 0.0
        %1241 = vmatprep.subr.mxu0 0.0
        %1242 = vmatpush1.msra.mxu0 0.0
        %1243 = vmatprep.subr.mxu0 0.0
        %1244 = vmatpush1.msra.mxu0 0.0
        %1245 = vmatprep.subr.mxu0 0.0
        %1246 = vmatpush1.msra.mxu0 0.0
        %1247 = vmatprep.mubr.f32.mxu0 0.0
        %1248 = vmatmul.mubr.f32.gmra.mrb[0].mxu0 %v1178
        %v1249 = vpop.f32.mrb[0].mxu0
        %v1250 = vadd.f32 %v1174, %v1249
        %v1251 = vpop.f32.mrb[0].mxu0
        %1252 = vmatprep.mubr.f32.mxu0 0.0
        %1253 = vmatmul.mubr.f32.gmra.mrb[0].mxu0 %v1181
        %v1254 = vpop.f32.mrb[0].mxu0
        %v1255 = vadd.f32 %v1174, %v1254
        %v1256 = vpop.f32.mrb[0].mxu0
        %1257 = vdwg.mxu0
        %1258 = vst [vmem:[%s218] sm:$0xff] %v1250
        %1259 = vst [vmem:[%s218 + $0x8] sm:$0xff] %v1255
        %s1260 = sand.u32 %s137, 1
        %s1261 = scalar_lea.sflag [#allocation3], %s1260
        %s1262 = sand.u32 %s137, 1
        %s1263 = smul.addr %s1262, 16
        %s1264 = scalar_lea.vmem [#allocation2], %s1263
        // Predicated region
        $region41: #{tpu_custom_call.1} parent=39 // pred_check
          %p1265 = pneg %p147
        $region42: #{tpu_custom_call.1} parent=39 // pred_check_branch
          %1267 = sbr.rel (%p1265) target = $region44
        $region43: #{tpu_custom_call.1} parent=39 // pred_region
          %s1268 = smul.u32 2, %s19
          %s1270 = ssub.s32 256, 256
          %1271 = vsyncadd %s1261, %s1270
          %s1272 = smul.addr %s1268, 128
          %s1273 = scalar_lea.hbm %s5, %s1272
          %s1274 = sshll.u32 %s1264, 4
          %s1275 = int_to_ptr.vmem [resolvable:$true] %s1274
          %1280 = dma.vmem_to_hbm [thread:$0]  %s1275, 256, %s1273, %s1261, 128, 128, 8
        $region44: #{tpu_custom_call.1} parent=39 // pred_fallthru
          _
      $region40: #{tpu_custom_call.1} parent=5 // pred_fallthru
        _
      %p1281 = scmp.le.s32.totalorder 2, %s14
      // Predicated region
      $region45: #{tpu_custom_call.1} parent=5 // pred_check
        %p1282 = pneg %p1281
      $region46: #{tpu_custom_call.1} parent=5 // pred_check_branch
        %1284 = sbr.rel (%p1282) target = $region48
      $region47: #{tpu_custom_call.1} parent=5 // pred_region
        %s1285 = ssub.s32 %s14, 2
        // Predicated region
        $region49: #{tpu_custom_call.1} parent=47 // pred_check
          %p1286 = pneg %p153
        $region50: #{tpu_custom_call.1} parent=47 // pred_check_branch
          %1288 = sbr.rel (%p1286) target = $region52
        $region51: #{tpu_custom_call.1} parent=47 // pred_region
          %s1289 = sand.u32 %s138, 1
          %s1290 = scalar_lea.sflag [#allocation3], %s1289
          %s1291 = sand.u32 %s138, 1
          %s1292 = smul.addr %s1291, 16
          %s1293 = scalar_lea.vmem [#allocation2], %s1292
          %1294 = dma.done %s1290, 256
        $region52: #{tpu_custom_call.1} parent=47 // pred_fallthru
          _
      $region48: #{tpu_custom_call.1} parent=5 // pred_fallthru
        _
    $region6: #{tpu_custom_call.1} parent=1 // loop_footer
      %s18 = sadd.s32 1, %s14
    $region7: #{tpu_custom_call.1} parent=1 // loop_footer_branch
      %13 = sbr.rel target = $region3
    $region8: #{tpu_custom_call.1} parent=1 // loop_exit
      _
    %1295 = vsyncpa [#allocation3], 1
    %s1296 = scalar_lea.sflag [#allocation3], 1
    %1297 = vsyncpa %s1296, 1

</llo_original>
